<compile_context>
chip_gen: v7x
topology: tpu7x:2x2x1
jax: 0.10.0
libtpu: 0.0.40
codegen_flags: <defaults>
</compile_context>

<pallas_src>
import functools

import jax
import jax.numpy as jnp
from jax.experimental import pallas as pl
from jax.experimental.pallas import tpu as pltpu

NEG_SLOPE = 0.01
LAYER_DIMS = [3, 64, 128, 256, 128, 64, 3]   # fc1..fc6
F_PAD = 128      # padded input feature width (lane-dense K for the first dot)
OUT_PAD = 128    # padded output width (lane-dense stores; sliced to 3 outside)


def _leaky_relu(x):
    return jnp.where(x > 0, x, NEG_SLOPE * x)


def _round_up(n, m):
    return ((n + m - 1) // m) * m


def _choose_tm(batch):
    """MXU-aligned batch tile: multiple of 256, capped at 1024, and — when the
    batch is large enough — at least two grid steps so both v7x TensorCores
    get a tile."""
    n_tiles = _round_up(max(batch, 1), 256) // 256
    if n_tiles <= 1:
        return 256
    return max(256, min(1024, 256 * (n_tiles // 2)))


def _ik_mlp_kernel(x_ref,
                   w1_ref, b1_ref, w2_ref, b2_ref, w3_ref, b3_ref,
                   w4_ref, b4_ref, w5_ref, b5_ref, w6_ref, b6_ref,
                   o_ref, *, compute_dtype):
    def dense(h, w_ref, b_ref, act):
        # bf16 (or f32) MXU matmul with f32 accumulation; bias + LeakyReLU in f32.
        y = jnp.dot(h.astype(compute_dtype), w_ref[...],
                    preferred_element_type=jnp.float32) + b_ref[...]
        return _leaky_relu(y) if act else y

    h = x_ref[...]                         # (tm, F_PAD) compute_dtype
    h = dense(h, w1_ref, b1_ref, True)     # (tm, 64)
    h = dense(h, w2_ref, b2_ref, True)     # (tm, 128)
    h = dense(h, w3_ref, b3_ref, True)     # (tm, 256)
    h = dense(h, w4_ref, b4_ref, True)     # (tm, 128)
    h = dense(h, w5_ref, b5_ref, True)     # (tm, 64)
    h = dense(h, w6_ref, b6_ref, False)    # (tm, OUT_PAD), no activation
    o_ref[...] = h.astype(o_ref.dtype)


@functools.partial(jax.jit, static_argnames=("tm", "use_bf16"))
def ik_mlp_pallas(x, params, tm=None, use_bf16=True):
    """x: (B, 3) f32; params: list of (W_(in,out), b_(1,out)) pairs."""
    B, Fin = x.shape
    assert Fin == LAYER_DIMS[0]
    assert len(params) == len(LAYER_DIMS) - 1

    if tm is None:
        tm = _choose_tm(B)
    b_pad = _round_up(B, tm)
    compute_dtype = jnp.bfloat16 if use_bf16 else jnp.float32

    # Pad the batch up to a multiple of tm and the K=3 edge up to 128 lanes.
    # Cast to the compute dtype here: the kernel casts before the first dot
    # anyway, so this halves the per-tile input DMA on the bf16 path with
    # identical numerics.
    x_p = jnp.pad(x.astype(jnp.float32),
                  ((0, b_pad - B), (0, F_PAD - Fin))).astype(compute_dtype)

    flat = [x_p]
    in_specs = [pl.BlockSpec((tm, F_PAD), lambda i: (i, 0))]
    n_layers = len(params)
    for li, (w, b) in enumerate(params):
        w = w.astype(jnp.float32)
        b = b.astype(jnp.float32).reshape(1, -1)
        if li == 0:                       # (3, 64)  -> (128, 64): zero rows
            w = jnp.pad(w, ((0, F_PAD - w.shape[0]), (0, 0)))
        if li == n_layers - 1:            # (64, 3)  -> (64, 128): zero cols
            w = jnp.pad(w, ((0, 0), (0, OUT_PAD - w.shape[1])))
            b = jnp.pad(b, ((0, 0), (0, OUT_PAD - b.shape[1])))
        w = w.astype(compute_dtype)       # bf16 matmul path (f32 accumulation)
        flat.extend([w, b])
        # Full weight / bias blocks with constant index_map -> no re-fetch
        # across grid steps; everything stays VMEM-resident.
        in_specs.append(pl.BlockSpec(w.shape, lambda i: (0, 0)))
        in_specs.append(pl.BlockSpec(b.shape, lambda i: (0, 0)))

    out = pl.pallas_call(
        functools.partial(_ik_mlp_kernel, compute_dtype=compute_dtype),
        out_shape=jax.ShapeDtypeStruct((b_pad, OUT_PAD), jnp.float32),
        grid_spec=pltpu.PrefetchScalarGridSpec(
            num_scalar_prefetch=0,
            grid=(b_pad // tm,),
            in_specs=in_specs,
            out_specs=pl.BlockSpec((tm, OUT_PAD), lambda i: (i, 0)),
        ),
        compiler_params=pltpu.CompilerParams(
            dimension_semantics=("parallel",)),
    )(*flat)

    return out[:B, :LAYER_DIMS[-1]]


def init_params(key):
    """Deterministic synthetic init (PyTorch-like uniform fan_in scaling)."""
    params = []
    for li, (fin, fout) in enumerate(zip(LAYER_DIMS[:-1], LAYER_DIMS[1:])):
        kw, kb, key = jax.random.split(jax.random.fold_in(key, li), 3)
        bound = 1.0 / jnp.sqrt(jnp.float32(fin))
        w = jax.random.uniform(kw, (fin, fout), jnp.float32, -bound, bound)
        b = jax.random.uniform(kb, (1, fout), jnp.float32, -bound, bound)
        params.append((w, b))
    return params


def ik_mlp_reference(x, params):
    h = x
    for i, (w, b) in enumerate(params):
        h = h @ w + b
        if i < len(params) - 1:
            h = jnp.where(h > 0, h, NEG_SLOPE * h)
    return h


if __name__ == "__main__":
    key = jax.random.PRNGKey(0)
    kx, kp = jax.random.split(key)

    B = 37      # small, non-multiple batch: exercises the padding path
    x = jax.random.normal(kx, (B, 3), jnp.float32)
    params = init_params(kp)

    ref = ik_mlp_reference(x, params)

    # Exact f32 path — strict check.
    out_f32 = jax.block_until_ready(ik_mlp_pallas(x, params, use_bf16=False))
    assert out_f32.shape == (B, 3), out_f32.shape
    assert jnp.allclose(out_f32, ref, atol=1e-5, rtol=1e-5), (
        float(jnp.max(jnp.abs(out_f32 - ref))))

    # Default fast path — bf16 matmuls, f32 accumulation.
    out = jax.block_until_ready(ik_mlp_pallas(x, params))
    assert out.shape == (B, 3), out.shape
    assert jnp.allclose(out, ref, atol=2e-2, rtol=2e-2), (
        float(jnp.max(jnp.abs(out - ref))))

    print("KERNEL_OK")
</pallas_src>

<mosaic_0001>
module attributes {stable_mosaic.version = 11 : i64} {
  func.func @_ik_mlp_kernel(%arg0: i32, %arg1: memref<256x128xf32, #tpu.memory_space<vmem>>, %arg2: memref<128x64xf32, #tpu.memory_space<vmem>>, %arg3: memref<1x64xf32, #tpu.memory_space<vmem>>, %arg4: memref<64x128xf32, #tpu.memory_space<vmem>>, %arg5: memref<1x128xf32, #tpu.memory_space<vmem>>, %arg6: memref<128x256xf32, #tpu.memory_space<vmem>>, %arg7: memref<1x256xf32, #tpu.memory_space<vmem>>, %arg8: memref<256x128xf32, #tpu.memory_space<vmem>>, %arg9: memref<1x128xf32, #tpu.memory_space<vmem>>, %arg10: memref<128x64xf32, #tpu.memory_space<vmem>>, %arg11: memref<1x64xf32, #tpu.memory_space<vmem>>, %arg12: memref<64x128xf32, #tpu.memory_space<vmem>>, %arg13: memref<1x128xf32, #tpu.memory_space<vmem>>, %arg14: memref<256x128xf32, #tpu.memory_space<vmem>>) attributes {dimension_semantics = [#tpu.dimension_semantics<parallel>], iteration_bounds = array<i64: 1>, scalar_prefetch = 0 : i64, scratch_operands = 0 : i64, tpu.core_type = #tpu.core_type<tc>, window_params = [{transform_indices = @transform_0, window_bounds = array<i64: 256, 128>}, {pipeline_mode = #tpu.pipeline_mode<synchronous>, transform_indices = @transform_1, window_bounds = array<i64: 128, 64>}, {pipeline_mode = #tpu.pipeline_mode<synchronous>, transform_indices = @transform_2, window_bounds = array<i64: 1, 64>}, {pipeline_mode = #tpu.pipeline_mode<synchronous>, transform_indices = @transform_3, window_bounds = array<i64: 64, 128>}, {pipeline_mode = #tpu.pipeline_mode<synchronous>, transform_indices = @transform_4, window_bounds = array<i64: 1, 128>}, {pipeline_mode = #tpu.pipeline_mode<synchronous>, transform_indices = @transform_5, window_bounds = array<i64: 128, 256>}, {pipeline_mode = #tpu.pipeline_mode<synchronous>, transform_indices = @transform_6, window_bounds = array<i64: 1, 256>}, {pipeline_mode = #tpu.pipeline_mode<synchronous>, transform_indices = @transform_7, window_bounds = array<i64: 256, 128>}, {pipeline_mode = #tpu.pipeline_mode<synchronous>, transform_indices = @transform_8, window_bounds = array<i64: 1, 128>}, {pipeline_mode = #tpu.pipeline_mode<synchronous>, transform_indices = @transform_9, window_bounds = array<i64: 128, 64>}, {pipeline_mode = #tpu.pipeline_mode<synchronous>, transform_indices = @transform_10, window_bounds = array<i64: 1, 64>}, {pipeline_mode = #tpu.pipeline_mode<synchronous>, transform_indices = @transform_11, window_bounds = array<i64: 64, 128>}, {pipeline_mode = #tpu.pipeline_mode<synchronous>, transform_indices = @transform_12, window_bounds = array<i64: 1, 128>}, {transform_indices = @transform_13, window_bounds = array<i64: 256, 128>}]} {
    %c0 = arith.constant 0 : index
    %c0_0 = arith.constant 0 : index
    %0 = vector.load %arg1[%c0, %c0_0] : memref<256x128xf32, #tpu.memory_space<vmem>>, vector<256x128xf32>
    %c0_1 = arith.constant 0 : index
    %c0_2 = arith.constant 0 : index
    %1 = vector.load %arg2[%c0_1, %c0_2] : memref<128x64xf32, #tpu.memory_space<vmem>>, vector<128x64xf32>
    %cst = arith.constant dense<0.000000e+00> : vector<256x64xf32>
    %2 = tpu.matmul %0, %1, %cst {dimension_numbers = #tpu.dot_dimension_numbers<[1], [0], [0], [1], [0, 0, 1, 1], [], []>} : vector<256x128xf32>, vector<128x64xf32>, vector<256x64xf32> -> vector<256x64xf32>
    %c0_3 = arith.constant 0 : index
    %c0_4 = arith.constant 0 : index
    %3 = vector.load %arg3[%c0_3, %c0_4] : memref<1x64xf32, #tpu.memory_space<vmem>>, vector<1x64xf32>
    %4 = vector.broadcast %3 : vector<1x64xf32> to vector<256x64xf32>
    %5 = arith.addf %2, %4 : vector<256x64xf32>
    %cst_5 = arith.constant 0.000000e+00 : f32
    %6 = vector.broadcast %cst_5 : f32 to vector<256x64xf32>
    %7 = arith.cmpf ogt, %5, %6 : vector<256x64xf32>
    %cst_6 = arith.constant 0.00999999977 : f32
    %8 = vector.broadcast %cst_6 : f32 to vector<256x64xf32>
    %9 = arith.mulf %8, %5 : vector<256x64xf32>
    %10 = arith.select %7, %5, %9 : vector<256x64xi1>, vector<256x64xf32>
    %c0_7 = arith.constant 0 : index
    %c0_8 = arith.constant 0 : index
    %11 = vector.load %arg4[%c0_7, %c0_8] : memref<64x128xf32, #tpu.memory_space<vmem>>, vector<64x128xf32>
    %cst_9 = arith.constant dense<0.000000e+00> : vector<256x128xf32>
    %12 = tpu.matmul %10, %11, %cst_9 {dimension_numbers = #tpu.dot_dimension_numbers<[1], [0], [0], [1], [0, 0, 1, 1], [], []>} : vector<256x64xf32>, vector<64x128xf32>, vector<256x128xf32> -> vector<256x128xf32>
    %c0_10 = arith.constant 0 : index
    %c0_11 = arith.constant 0 : index
    %13 = vector.load %arg5[%c0_10, %c0_11] : memref<1x128xf32, #tpu.memory_space<vmem>>, vector<1x128xf32>
    %14 = vector.broadcast %13 : vector<1x128xf32> to vector<256x128xf32>
    %15 = arith.addf %12, %14 : vector<256x128xf32>
    %cst_12 = arith.constant 0.000000e+00 : f32
    %16 = vector.broadcast %cst_12 : f32 to vector<256x128xf32>
    %17 = arith.cmpf ogt, %15, %16 : vector<256x128xf32>
    %cst_13 = arith.constant 0.00999999977 : f32
    %18 = vector.broadcast %cst_13 : f32 to vector<256x128xf32>
    %19 = arith.mulf %18, %15 : vector<256x128xf32>
    %20 = arith.select %17, %15, %19 : vector<256x128xi1>, vector<256x128xf32>
    %c0_14 = arith.constant 0 : index
    %c0_15 = arith.constant 0 : index
    %21 = vector.load %arg6[%c0_14, %c0_15] : memref<128x256xf32, #tpu.memory_space<vmem>>, vector<128x256xf32>
    %cst_16 = arith.constant dense<0.000000e+00> : vector<256x256xf32>
    %22 = tpu.matmul %20, %21, %cst_16 {dimension_numbers = #tpu.dot_dimension_numbers<[1], [0], [0], [1], [0, 0, 1, 1], [], []>} : vector<256x128xf32>, vector<128x256xf32>, vector<256x256xf32> -> vector<256x256xf32>
    %c0_17 = arith.constant 0 : index
    %c0_18 = arith.constant 0 : index
    %23 = vector.load %arg7[%c0_17, %c0_18] : memref<1x256xf32, #tpu.memory_space<vmem>>, vector<1x256xf32>
    %24 = vector.broadcast %23 : vector<1x256xf32> to vector<256x256xf32>
    %25 = arith.addf %22, %24 : vector<256x256xf32>
    %cst_19 = arith.constant 0.000000e+00 : f32
    %26 = vector.broadcast %cst_19 : f32 to vector<256x256xf32>
    %27 = arith.cmpf ogt, %25, %26 : vector<256x256xf32>
    %cst_20 = arith.constant 0.00999999977 : f32
    %28 = vector.broadcast %cst_20 : f32 to vector<256x256xf32>
    %29 = arith.mulf %28, %25 : vector<256x256xf32>
    %30 = arith.select %27, %25, %29 : vector<256x256xi1>, vector<256x256xf32>
    %c0_21 = arith.constant 0 : index
    %c0_22 = arith.constant 0 : index
    %31 = vector.load %arg8[%c0_21, %c0_22] : memref<256x128xf32, #tpu.memory_space<vmem>>, vector<256x128xf32>
    %cst_23 = arith.constant dense<0.000000e+00> : vector<256x128xf32>
    %32 = tpu.matmul %30, %31, %cst_23 {dimension_numbers = #tpu.dot_dimension_numbers<[1], [0], [0], [1], [0, 0, 1, 1], [], []>} : vector<256x256xf32>, vector<256x128xf32>, vector<256x128xf32> -> vector<256x128xf32>
    %c0_24 = arith.constant 0 : index
    %c0_25 = arith.constant 0 : index
    %33 = vector.load %arg9[%c0_24, %c0_25] : memref<1x128xf32, #tpu.memory_space<vmem>>, vector<1x128xf32>
    %34 = vector.broadcast %33 : vector<1x128xf32> to vector<256x128xf32>
    %35 = arith.addf %32, %34 : vector<256x128xf32>
    %cst_26 = arith.constant 0.000000e+00 : f32
    %36 = vector.broadcast %cst_26 : f32 to vector<256x128xf32>
    %37 = arith.cmpf ogt, %35, %36 : vector<256x128xf32>
    %cst_27 = arith.constant 0.00999999977 : f32
    %38 = vector.broadcast %cst_27 : f32 to vector<256x128xf32>
    %39 = arith.mulf %38, %35 : vector<256x128xf32>
    %40 = arith.select %37, %35, %39 : vector<256x128xi1>, vector<256x128xf32>
    %c0_28 = arith.constant 0 : index
    %c0_29 = arith.constant 0 : index
    %41 = vector.load %arg10[%c0_28, %c0_29] : memref<128x64xf32, #tpu.memory_space<vmem>>, vector<128x64xf32>
    %cst_30 = arith.constant dense<0.000000e+00> : vector<256x64xf32>
    %42 = tpu.matmul %40, %41, %cst_30 {dimension_numbers = #tpu.dot_dimension_numbers<[1], [0], [0], [1], [0, 0, 1, 1], [], []>} : vector<256x128xf32>, vector<128x64xf32>, vector<256x64xf32> -> vector<256x64xf32>
    %c0_31 = arith.constant 0 : index
    %c0_32 = arith.constant 0 : index
    %43 = vector.load %arg11[%c0_31, %c0_32] : memref<1x64xf32, #tpu.memory_space<vmem>>, vector<1x64xf32>
    %44 = vector.broadcast %43 : vector<1x64xf32> to vector<256x64xf32>
    %45 = arith.addf %42, %44 : vector<256x64xf32>
    %cst_33 = arith.constant 0.000000e+00 : f32
    %46 = vector.broadcast %cst_33 : f32 to vector<256x64xf32>
    %47 = arith.cmpf ogt, %45, %46 : vector<256x64xf32>
    %cst_34 = arith.constant 0.00999999977 : f32
    %48 = vector.broadcast %cst_34 : f32 to vector<256x64xf32>
    %49 = arith.mulf %48, %45 : vector<256x64xf32>
    %50 = arith.select %47, %45, %49 : vector<256x64xi1>, vector<256x64xf32>
    %c0_35 = arith.constant 0 : index
    %c0_36 = arith.constant 0 : index
    %51 = vector.load %arg12[%c0_35, %c0_36] : memref<64x128xf32, #tpu.memory_space<vmem>>, vector<64x128xf32>
    %cst_37 = arith.constant dense<0.000000e+00> : vector<256x128xf32>
    %52 = tpu.matmul %50, %51, %cst_37 {dimension_numbers = #tpu.dot_dimension_numbers<[1], [0], [0], [1], [0, 0, 1, 1], [], []>} : vector<256x64xf32>, vector<64x128xf32>, vector<256x128xf32> -> vector<256x128xf32>
    %c0_38 = arith.constant 0 : index
    %c0_39 = arith.constant 0 : index
    %53 = vector.load %arg13[%c0_38, %c0_39] : memref<1x128xf32, #tpu.memory_space<vmem>>, vector<1x128xf32>
    %54 = vector.broadcast %53 : vector<1x128xf32> to vector<256x128xf32>
    %55 = arith.addf %52, %54 : vector<256x128xf32>
    %c0_40 = arith.constant 0 : index
    %c0_41 = arith.constant 0 : index
    %56 = vector.load %arg14[%c0_40, %c0_41] : memref<256x128xf32, #tpu.memory_space<vmem>>, vector<256x128xf32>
    tpu.vector_store %arg14[%c0_40, %c0_41], %55 {strides = array<i32>} : memref<256x128xf32, #tpu.memory_space<vmem>>, vector<256x128xf32>,
    return
  }
  func.func @transform_0(%arg0: i32) -> (i32, i32) {
    %c0_i32 = arith.constant 0 : i32
    %c0_i32_0 = arith.constant 0 : i32
    return %arg0, %c0_i32 : i32, i32
  }
  func.func @transform_1(%arg0: i32) -> (i32, i32) {
    %c0_i32 = arith.constant 0 : i32
    %c0_i32_0 = arith.constant 0 : i32
    %c0_i32_1 = arith.constant 0 : i32
    return %c0_i32, %c0_i32_0 : i32, i32
  }
  func.func @transform_2(%arg0: i32) -> (i32, i32) {
    %c0_i32 = arith.constant 0 : i32
    %c0_i32_0 = arith.constant 0 : i32
    %c0_i32_1 = arith.constant 0 : i32
    return %c0_i32, %c0_i32_0 : i32, i32
  }
  func.func @transform_3(%arg0: i32) -> (i32, i32) {
    %c0_i32 = arith.constant 0 : i32
    %c0_i32_0 = arith.constant 0 : i32
    %c0_i32_1 = arith.constant 0 : i32
    return %c0_i32, %c0_i32_0 : i32, i32
  }
  func.func @transform_4(%arg0: i32) -> (i32, i32) {
    %c0_i32 = arith.constant 0 : i32
    %c0_i32_0 = arith.constant 0 : i32
    %c0_i32_1 = arith.constant 0 : i32
    return %c0_i32, %c0_i32_0 : i32, i32
  }
  func.func @transform_5(%arg0: i32) -> (i32, i32) {
    %c0_i32 = arith.constant 0 : i32
    %c0_i32_0 = arith.constant 0 : i32
    %c0_i32_1 = arith.constant 0 : i32
    return %c0_i32, %c0_i32_0 : i32, i32
  }
  func.func @transform_6(%arg0: i32) -> (i32, i32) {
    %c0_i32 = arith.constant 0 : i32
    %c0_i32_0 = arith.constant 0 : i32
    %c0_i32_1 = arith.constant 0 : i32
    return %c0_i32, %c0_i32_0 : i32, i32
  }
  func.func @transform_7(%arg0: i32) -> (i32, i32) {
    %c0_i32 = arith.constant 0 : i32
    %c0_i32_0 = arith.constant 0 : i32
    %c0_i32_1 = arith.constant 0 : i32
    return %c0_i32, %c0_i32_0 : i32, i32
  }
  func.func @transform_8(%arg0: i32) -> (i32, i32) {
    %c0_i32 = arith.constant 0 : i32
    %c0_i32_0 = arith.constant 0 : i32
    %c0_i32_1 = arith.constant 0 : i32
    return %c0_i32, %c0_i32_0 : i32, i32
  }
  func.func @transform_9(%arg0: i32) -> (i32, i32) {
    %c0_i32 = arith.constant 0 : i32
    %c0_i32_0 = arith.constant 0 : i32
    %c0_i32_1 = arith.constant 0 : i32
    return %c0_i32, %c0_i32_0 : i32, i32
  }
  func.func @transform_10(%arg0: i32) -> (i32, i32) {
    %c0_i32 = arith.constant 0 : i32
    %c0_i32_0 = arith.constant 0 : i32
    %c0_i32_1 = arith.constant 0 : i32
    return %c0_i32, %c0_i32_0 : i32, i32
  }
  func.func @transform_11(%arg0: i32) -> (i32, i32) {
    %c0_i32 = arith.constant 0 : i32
    %c0_i32_0 = arith.constant 0 : i32
    %c0_i32_1 = arith.constant 0 : i32
    return %c0_i32, %c0_i32_0 : i32, i32
  }
  func.func @transform_12(%arg0: i32) -> (i32, i32) {
    %c0_i32 = arith.constant 0 : i32
    %c0_i32_0 = arith.constant 0 : i32
    %c0_i32_1 = arith.constant 0 : i32
    return %c0_i32, %c0_i32_0 : i32, i32
  }
  func.func @transform_13(%arg0: i32) -> (i32, i32) {
    %c0_i32 = arith.constant 0 : i32
    %c0_i32_0 = arith.constant 0 : i32
    return %arg0, %c0_i32 : i32, i32
  }
}

</mosaic_0001>

<llo_original>
// kernel: ik_mlp_pallas.1
$region0: #{ik_mlp_pallas.1}
  #allocation0 [shape = 'u32[]', space=smem, size = 0x4, offset = 0x4, fixed_abs, tag = 'smem constant byte address 0x4 - core index']
  #allocation1 [shape = 'u32[144,128]{1,0:T(1,128)}', space=vmem, size = 0x12000, scoped, tag = 'internal scratch']
  %s0 = inlined_call_operand.vmem [shape: f32[256,128], index: 0, kind: input, shape index: {}]
  %s1 = inlined_call_operand.vmem [shape: f32[128,64], index: 1, kind: input, shape index: {}]
  %s2 = inlined_call_operand.vmem [shape: f32[1,64], index: 2, kind: input, shape index: {}]
  %s3 = inlined_call_operand.vmem [shape: f32[64,128], index: 3, kind: input, shape index: {}]
  %s4 = inlined_call_operand.vmem [shape: f32[1,128], index: 4, kind: input, shape index: {}]
  %s5 = inlined_call_operand.vmem [shape: f32[128,256], index: 5, kind: input, shape index: {}]
  %s6 = inlined_call_operand.vmem [shape: f32[1,256], index: 6, kind: input, shape index: {}]
  %s7 = inlined_call_operand.vmem [shape: f32[256,128], index: 7, kind: input, shape index: {}]
  %s8 = inlined_call_operand.vmem [shape: f32[1,128], index: 8, kind: input, shape index: {}]
  %s9 = inlined_call_operand.vmem [shape: f32[128,64], index: 9, kind: input, shape index: {}]
  %s10 = inlined_call_operand.vmem [shape: f32[1,64], index: 10, kind: input, shape index: {}]
  %s11 = inlined_call_operand.vmem [shape: f32[64,128], index: 11, kind: input, shape index: {}]
  %s12 = inlined_call_operand.vmem [shape: f32[1,128], index: 12, kind: input, shape index: {}]
  %s13 = inlined_call_operand.vmem [shape: f32[256,128], index: 13, kind: output, shape index: {}]
  %s14 = sld [smem:[#allocation0]]
  $region62: #{ik_mlp_pallas.1} parent=0
    _
  %s16 = ssub.s32 1, %s14
  %s17 = scalar_select 0, %s16, %s14
  // Predicated region
  $region2: #{ik_mlp_pallas.1} parent=0 // pred_check
    _
  $region3: #{ik_mlp_pallas.1} parent=0 // pred_check_branch
    %19 = sbr.rel (0) target = $region5
  $region4: #{ik_mlp_pallas.1} parent=0 // pred_region
    _
  $region5: #{ik_mlp_pallas.1} parent=0 // pred_fallthru
    _
  // Predicated region
  $region6: #{ik_mlp_pallas.1} parent=0 // pred_check
    _
  $region7: #{ik_mlp_pallas.1} parent=0 // pred_check_branch
    %21 = sbr.rel (0) target = $region9
  $region8: #{ik_mlp_pallas.1} parent=0 // pred_region
    _
  $region9: #{ik_mlp_pallas.1} parent=0 // pred_fallthru
    _
  // Predicated region
  $region10: #{ik_mlp_pallas.1} parent=0 // pred_check
    _
  $region11: #{ik_mlp_pallas.1} parent=0 // pred_check_branch
    %23 = sbr.rel (0) target = $region13
  $region12: #{ik_mlp_pallas.1} parent=0 // pred_region
    _
  $region13: #{ik_mlp_pallas.1} parent=0 // pred_fallthru
    _
  // Predicated region
  $region14: #{ik_mlp_pallas.1} parent=0 // pred_check
    _
  $region15: #{ik_mlp_pallas.1} parent=0 // pred_check_branch
    %25 = sbr.rel (0) target = $region17
  $region16: #{ik_mlp_pallas.1} parent=0 // pred_region
    _
  $region17: #{ik_mlp_pallas.1} parent=0 // pred_fallthru
    _
  // Predicated region
  $region18: #{ik_mlp_pallas.1} parent=0 // pred_check
    _
  $region19: #{ik_mlp_pallas.1} parent=0 // pred_check_branch
    %27 = sbr.rel (0) target = $region21
  $region20: #{ik_mlp_pallas.1} parent=0 // pred_region
    _
  $region21: #{ik_mlp_pallas.1} parent=0 // pred_fallthru
    _
  // Predicated region
  $region22: #{ik_mlp_pallas.1} parent=0 // pred_check
    _
  $region23: #{ik_mlp_pallas.1} parent=0 // pred_check_branch
    %29 = sbr.rel (0) target = $region25
  $region24: #{ik_mlp_pallas.1} parent=0 // pred_region
    _
  $region25: #{ik_mlp_pallas.1} parent=0 // pred_fallthru
    _
  // Predicated region
  $region26: #{ik_mlp_pallas.1} parent=0 // pred_check
    _
  $region27: #{ik_mlp_pallas.1} parent=0 // pred_check_branch
    %31 = sbr.rel (0) target = $region29
  $region28: #{ik_mlp_pallas.1} parent=0 // pred_region
    _
  $region29: #{ik_mlp_pallas.1} parent=0 // pred_fallthru
    _
  // Predicated region
  $region30: #{ik_mlp_pallas.1} parent=0 // pred_check
    _
  $region31: #{ik_mlp_pallas.1} parent=0 // pred_check_branch
    %33 = sbr.rel (0) target = $region33
  $region32: #{ik_mlp_pallas.1} parent=0 // pred_region
    _
  $region33: #{ik_mlp_pallas.1} parent=0 // pred_fallthru
    _
  // Predicated region
  $region34: #{ik_mlp_pallas.1} parent=0 // pred_check
    _
  $region35: #{ik_mlp_pallas.1} parent=0 // pred_check_branch
    %35 = sbr.rel (0) target = $region37
  $region36: #{ik_mlp_pallas.1} parent=0 // pred_region
    _
  $region37: #{ik_mlp_pallas.1} parent=0 // pred_fallthru
    _
  // Predicated region
  $region38: #{ik_mlp_pallas.1} parent=0 // pred_check
    _
  $region39: #{ik_mlp_pallas.1} parent=0 // pred_check_branch
    %37 = sbr.rel (0) target = $region41
  $region40: #{ik_mlp_pallas.1} parent=0 // pred_region
    _
  $region41: #{ik_mlp_pallas.1} parent=0 // pred_fallthru
    _
  // Predicated region
  $region42: #{ik_mlp_pallas.1} parent=0 // pred_check
    _
  $region43: #{ik_mlp_pallas.1} parent=0 // pred_check_branch
    %39 = sbr.rel (0) target = $region45
  $region44: #{ik_mlp_pallas.1} parent=0 // pred_region
    _
  $region45: #{ik_mlp_pallas.1} parent=0 // pred_fallthru
    _
  // Predicated region
  $region46: #{ik_mlp_pallas.1} parent=0 // pred_check
    _
  $region47: #{ik_mlp_pallas.1} parent=0 // pred_check_branch
    %41 = sbr.rel (0) target = $region49
  $region48: #{ik_mlp_pallas.1} parent=0 // pred_region
    _
  $region49: #{ik_mlp_pallas.1} parent=0 // pred_fallthru
    _
  // Predicated region
  $region50: #{ik_mlp_pallas.1} parent=0 // pred_check
    _
  $region51: #{ik_mlp_pallas.1} parent=0 // pred_check_branch
    %43 = sbr.rel (0) target = $region53
  $region52: #{ik_mlp_pallas.1} parent=0 // pred_region
    _
  $region53: #{ik_mlp_pallas.1} parent=0 // pred_fallthru
    _
  %v44 = vld [vmem:[%s0] sm:$0xff]
  %v45 = vld [vmem:[%s0 + $0x8] sm:$0xff]
  %v46 = vld [vmem:[%s0 + $0x10] sm:$0xff]
  %v47 = vld [vmem:[%s0 + $0x18] sm:$0xff]
  %v48 = vld [vmem:[%s0 + $0x20] sm:$0xff]
  %v49 = vld [vmem:[%s0 + $0x28] sm:$0xff]
  %v50 = vld [vmem:[%s0 + $0x30] sm:$0xff]
  %v51 = vld [vmem:[%s0 + $0x38] sm:$0xff]
  %v52 = vld [vmem:[%s0 + $0x40] sm:$0xff]
  %v53 = vld [vmem:[%s0 + $0x48] sm:$0xff]
  %v54 = vld [vmem:[%s0 + $0x50] sm:$0xff]
  %v55 = vld [vmem:[%s0 + $0x58] sm:$0xff]
  %v56 = vld [vmem:[%s0 + $0x60] sm:$0xff]
  %v57 = vld [vmem:[%s0 + $0x68] sm:$0xff]
  %v58 = vld [vmem:[%s0 + $0x70] sm:$0xff]
  %v59 = vld [vmem:[%s0 + $0x78] sm:$0xff]
  %v60 = vld [vmem:[%s0 + $0x80] sm:$0xff]
  %v61 = vld [vmem:[%s0 + $0x88] sm:$0xff]
  %v62 = vld [vmem:[%s0 + $0x90] sm:$0xff]
  %v63 = vld [vmem:[%s0 + $0x98] sm:$0xff]
  %v64 = vld [vmem:[%s0 + $0xa0] sm:$0xff]
  %v65 = vld [vmem:[%s0 + $0xa8] sm:$0xff]
  %v66 = vld [vmem:[%s0 + $0xb0] sm:$0xff]
  %v67 = vld [vmem:[%s0 + $0xb8] sm:$0xff]
  %v68 = vld [vmem:[%s0 + $0xc0] sm:$0xff]
  %v69 = vld [vmem:[%s0 + $0xc8] sm:$0xff]
  %v70 = vld [vmem:[%s0 + $0xd0] sm:$0xff]
  %v71 = vld [vmem:[%s0 + $0xd8] sm:$0xff]
  %v72 = vld [vmem:[%s0 + $0xe0] sm:$0xff]
  %v73 = vld [vmem:[%s0 + $0xe8] sm:$0xff]
  %v74 = vld [vmem:[%s0 + $0xf0] sm:$0xff]
  %v75 = vld [vmem:[%s0 + $0xf8] sm:$0xff]
  %v76 = vld [vmem:[%s1] sm:$0xff]
  %v77 = vld [vmem:[%s1 + $0x8] sm:$0xff]
  %v78 = vld [vmem:[%s1 + $0x10] sm:$0xff]
  %v79 = vld [vmem:[%s1 + $0x18] sm:$0xff]
  %v80 = vld [vmem:[%s1 + $0x20] sm:$0xff]
  %v81 = vld [vmem:[%s1 + $0x28] sm:$0xff]
  %v82 = vld [vmem:[%s1 + $0x30] sm:$0xff]
  %v83 = vld [vmem:[%s1 + $0x38] sm:$0xff]
  %v84 = vld [vmem:[%s1 + $0x40] sm:$0xff]
  %v85 = vld [vmem:[%s1 + $0x48] sm:$0xff]
  %v86 = vld [vmem:[%s1 + $0x50] sm:$0xff]
  %v87 = vld [vmem:[%s1 + $0x58] sm:$0xff]
  %v88 = vld [vmem:[%s1 + $0x60] sm:$0xff]
  %v89 = vld [vmem:[%s1 + $0x68] sm:$0xff]
  %v90 = vld [vmem:[%s1 + $0x70] sm:$0xff]
  %v91 = vld [vmem:[%s1 + $0x78] sm:$0xff]
  %v92 = vld [vmem:[%s2] sm:$0x1]
  %v94 = vlaneseq
  %v95 = vshrl.u32 %v94, 7
  %v96 = vsub.s32 0, %v95
  %v97 = vrot.slane %v92, %v96
  %99 = vmatprep.subr.mxu0 0.0
  %100 = vmatpush1.msra.mxu0 %v76
  %101 = vmatprep.subr.mxu0 0.0
  %102 = vmatpush1.msra.mxu0 %v77
  %103 = vmatprep.subr.mxu0 0.0
  %104 = vmatpush1.msra.mxu0 %v78
  %105 = vmatprep.subr.mxu0 0.0
  %106 = vmatpush1.msra.mxu0 %v79
  %107 = vmatprep.subr.mxu0 0.0
  %108 = vmatpush1.msra.mxu0 %v80
  %109 = vmatprep.subr.mxu0 0.0
  %110 = vmatpush1.msra.mxu0 %v81
  %111 = vmatprep.subr.mxu0 0.0
  %112 = vmatpush1.msra.mxu0 %v82
  %113 = vmatprep.subr.mxu0 0.0
  %114 = vmatpush1.msra.mxu0 %v83
  %115 = vmatprep.subr.mxu0 0.0
  %116 = vmatpush1.msra.mxu0 %v84
  %117 = vmatprep.subr.mxu0 0.0
  %118 = vmatpush1.msra.mxu0 %v85
  %119 = vmatprep.subr.mxu0 0.0
  %120 = vmatpush1.msra.mxu0 %v86
  %121 = vmatprep.subr.mxu0 0.0
  %122 = vmatpush1.msra.mxu0 %v87
  %123 = vmatprep.subr.mxu0 0.0
  %124 = vmatpush1.msra.mxu0 %v88
  %125 = vmatprep.subr.mxu0 0.0
  %126 = vmatpush1.msra.mxu0 %v89
  %127 = vmatprep.subr.mxu0 0.0
  %128 = vmatpush1.msra.mxu0 %v90
  %129 = vmatprep.subr.mxu0 0.0
  %130 = vmatpush1.msra.mxu0 %v91
  %131 = vmatprep.subr.mxu0 0.0
  %132 = vmatpush1.msra.mxu0 0.0
  %133 = vmatprep.subr.mxu0 0.0
  %134 = vmatpush1.msra.mxu0 0.0
  %135 = vmatprep.subr.mxu0 0.0
  %136 = vmatpush1.msra.mxu0 0.0
  %137 = vmatprep.subr.mxu0 0.0
  %138 = vmatpush1.msra.mxu0 0.0
  %139 = vmatprep.subr.mxu0 0.0
  %140 = vmatpush1.msra.mxu0 0.0
  %141 = vmatprep.subr.mxu0 0.0
  %142 = vmatpush1.msra.mxu0 0.0
  %143 = vmatprep.subr.mxu0 0.0
  %144 = vmatpush1.msra.mxu0 0.0
  %145 = vmatprep.subr.mxu0 0.0
  %146 = vmatpush1.msra.mxu0 0.0
  %147 = vmatprep.subr.mxu0 0.0
  %148 = vmatpush1.msra.mxu0 0.0
  %149 = vmatprep.subr.mxu0 0.0
  %150 = vmatpush1.msra.mxu0 0.0
  %151 = vmatprep.subr.mxu0 0.0
  %152 = vmatpush1.msra.mxu0 0.0
  %153 = vmatprep.subr.mxu0 0.0
  %154 = vmatpush1.msra.mxu0 0.0
  %155 = vmatprep.subr.mxu0 0.0
  %156 = vmatpush1.msra.mxu0 0.0
  %157 = vmatprep.subr.mxu0 0.0
  %158 = vmatpush1.msra.mxu0 0.0
  %159 = vmatprep.subr.mxu0 0.0
  %160 = vmatpush1.msra.mxu0 0.0
  %161 = vmatprep.subr.mxu0 0.0
  %162 = vmatpush1.msra.mxu0 0.0
  %163 = vmatprep.mubr.f32.mxu0 0.0
  %164 = vmatmul.mubr.f32.gmra.mrb[0].mxu0 %v44
  %v165 = vpop.f32.mrb[0].mxu0
  %v166 = vadd.f32 %v97, %v165
  %v167 = vpop.f32.mrb[0].mxu0
  %168 = vmatprep.mubr.f32.mxu0 0.0
  %169 = vmatmul.mubr.f32.gmra.mrb[0].mxu0 %v45
  %v170 = vpop.f32.mrb[0].mxu0
  %v171 = vadd.f32 %v97, %v170
  %v172 = vpop.f32.mrb[0].mxu0
  %173 = vmatprep.mubr.f32.mxu0 0.0
  %174 = vmatmul.mubr.f32.gmra.mrb[0].mxu0 %v46
  %v175 = vpop.f32.mrb[0].mxu0
  %v176 = vadd.f32 %v97, %v175
  %v177 = vpop.f32.mrb[0].mxu0
  %178 = vmatprep.mubr.f32.mxu0 0.0
  %179 = vmatmul.mubr.f32.gmra.mrb[0].mxu0 %v47
  %v180 = vpop.f32.mrb[0].mxu0
  %v181 = vadd.f32 %v97, %v180
  %v182 = vpop.f32.mrb[0].mxu0
  %183 = vmatprep.mubr.f32.mxu0 0.0
  %184 = vmatmul.mubr.f32.gmra.mrb[0].mxu0 %v48
  %v185 = vpop.f32.mrb[0].mxu0
  %v186 = vadd.f32 %v97, %v185
  %v187 = vpop.f32.mrb[0].mxu0
  %188 = vmatprep.mubr.f32.mxu0 0.0
  %189 = vmatmul.mubr.f32.gmra.mrb[0].mxu0 %v49
  %v190 = vpop.f32.mrb[0].mxu0
  %v191 = vadd.f32 %v97, %v190
  %v192 = vpop.f32.mrb[0].mxu0
  %193 = vmatprep.mubr.f32.mxu0 0.0
  %194 = vmatmul.mubr.f32.gmra.mrb[0].mxu0 %v50
  %v195 = vpop.f32.mrb[0].mxu0
  %v196 = vadd.f32 %v97, %v195
  %v197 = vpop.f32.mrb[0].mxu0
  %198 = vmatprep.mubr.f32.mxu0 0.0
  %199 = vmatmul.mubr.f32.gmra.mrb[0].mxu0 %v51
  %v200 = vpop.f32.mrb[0].mxu0
  %v201 = vadd.f32 %v97, %v200
  %v202 = vpop.f32.mrb[0].mxu0
  %203 = vmatprep.mubr.f32.mxu0 0.0
  %204 = vmatmul.mubr.f32.gmra.mrb[0].mxu0 %v52
  %v205 = vpop.f32.mrb[0].mxu0
  %v206 = vadd.f32 %v97, %v205
  %v207 = vpop.f32.mrb[0].mxu0
  %208 = vmatprep.mubr.f32.mxu0 0.0
  %209 = vmatmul.mubr.f32.gmra.mrb[0].mxu0 %v53
  %v210 = vpop.f32.mrb[0].mxu0
  %v211 = vadd.f32 %v97, %v210
  %v212 = vpop.f32.mrb[0].mxu0
  %213 = vmatprep.mubr.f32.mxu0 0.0
  %214 = vmatmul.mubr.f32.gmra.mrb[0].mxu0 %v54
  %v215 = vpop.f32.mrb[0].mxu0
  %v216 = vadd.f32 %v97, %v215
  %v217 = vpop.f32.mrb[0].mxu0
  %218 = vmatprep.mubr.f32.mxu0 0.0
  %219 = vmatmul.mubr.f32.gmra.mrb[0].mxu0 %v55
  %v220 = vpop.f32.mrb[0].mxu0
  %v221 = vadd.f32 %v97, %v220
  %v222 = vpop.f32.mrb[0].mxu0
  %223 = vmatprep.mubr.f32.mxu0 0.0
  %224 = vmatmul.mubr.f32.gmra.mrb[0].mxu0 %v56
  %v225 = vpop.f32.mrb[0].mxu0
  %v226 = vadd.f32 %v97, %v225
  %v227 = vpop.f32.mrb[0].mxu0
  %228 = vmatprep.mubr.f32.mxu0 0.0
  %229 = vmatmul.mubr.f32.gmra.mrb[0].mxu0 %v57
  %v230 = vpop.f32.mrb[0].mxu0
  %v231 = vadd.f32 %v97, %v230
  %v232 = vpop.f32.mrb[0].mxu0
  %233 = vmatprep.mubr.f32.mxu0 0.0
  %234 = vmatmul.mubr.f32.gmra.mrb[0].mxu0 %v58
  %v235 = vpop.f32.mrb[0].mxu0
  %v236 = vadd.f32 %v97, %v235
  %v237 = vpop.f32.mrb[0].mxu0
  %238 = vmatprep.mubr.f32.mxu0 0.0
  %239 = vmatmul.mubr.f32.gmra.mrb[0].mxu0 %v59
  %v240 = vpop.f32.mrb[0].mxu0
  %v241 = vadd.f32 %v97, %v240
  %v242 = vpop.f32.mrb[0].mxu0
  %243 = vmatprep.mubr.f32.mxu0 0.0
  %244 = vmatmul.mubr.f32.gmra.mrb[0].mxu0 %v60
  %v245 = vpop.f32.mrb[0].mxu0
  %v246 = vadd.f32 %v97, %v245
  %v247 = vpop.f32.mrb[0].mxu0
  %248 = vmatprep.mubr.f32.mxu0 0.0
  %249 = vmatmul.mubr.f32.gmra.mrb[0].mxu0 %v61
  %v250 = vpop.f32.mrb[0].mxu0
  %v251 = vadd.f32 %v97, %v250
  %v252 = vpop.f32.mrb[0].mxu0
  %253 = vmatprep.mubr.f32.mxu0 0.0
  %254 = vmatmul.mubr.f32.gmra.mrb[0].mxu0 %v62
  %v255 = vpop.f32.mrb[0].mxu0
  %v256 = vadd.f32 %v97, %v255
  %v257 = vpop.f32.mrb[0].mxu0
  %258 = vmatprep.mubr.f32.mxu0 0.0
  %259 = vmatmul.mubr.f32.gmra.mrb[0].mxu0 %v63
  %v260 = vpop.f32.mrb[0].mxu0
  %v261 = vadd.f32 %v97, %v260
  %v262 = vpop.f32.mrb[0].mxu0
  %263 = vmatprep.mubr.f32.mxu0 0.0
  %264 = vmatmul.mubr.f32.gmra.mrb[0].mxu0 %v64
  %v265 = vpop.f32.mrb[0].mxu0
  %v266 = vadd.f32 %v97, %v265
  %v267 = vpop.f32.mrb[0].mxu0
  %268 = vmatprep.mubr.f32.mxu0 0.0
  %269 = vmatmul.mubr.f32.gmra.mrb[0].mxu0 %v65
  %v270 = vpop.f32.mrb[0].mxu0
  %v271 = vadd.f32 %v97, %v270
  %v272 = vpop.f32.mrb[0].mxu0
  %273 = vmatprep.mubr.f32.mxu0 0.0
  %274 = vmatmul.mubr.f32.gmra.mrb[0].mxu0 %v66
  %v275 = vpop.f32.mrb[0].mxu0
  %v276 = vadd.f32 %v97, %v275
  %v277 = vpop.f32.mrb[0].mxu0
  %278 = vmatprep.mubr.f32.mxu0 0.0
  %279 = vmatmul.mubr.f32.gmra.mrb[0].mxu0 %v67
  %v280 = vpop.f32.mrb[0].mxu0
  %v281 = vadd.f32 %v97, %v280
  %v282 = vpop.f32.mrb[0].mxu0
  %283 = vmatprep.mubr.f32.mxu0 0.0
  %284 = vmatmul.mubr.f32.gmra.mrb[0].mxu0 %v68
  %v285 = vpop.f32.mrb[0].mxu0
  %v286 = vadd.f32 %v97, %v285
  %v287 = vpop.f32.mrb[0].mxu0
  %288 = vmatprep.mubr.f32.mxu0 0.0
  %289 = vmatmul.mubr.f32.gmra.mrb[0].mxu0 %v69
  %v290 = vpop.f32.mrb[0].mxu0
  %v291 = vadd.f32 %v97, %v290
  %v292 = vpop.f32.mrb[0].mxu0
  %293 = vmatprep.mubr.f32.mxu0 0.0
  %294 = vmatmul.mubr.f32.gmra.mrb[0].mxu0 %v70
  %v295 = vpop.f32.mrb[0].mxu0
  %v296 = vadd.f32 %v97, %v295
  %v297 = vpop.f32.mrb[0].mxu0
  %298 = vmatprep.mubr.f32.mxu0 0.0
  %299 = vmatmul.mubr.f32.gmra.mrb[0].mxu0 %v71
  %v300 = vpop.f32.mrb[0].mxu0
  %v301 = vadd.f32 %v97, %v300
  %v302 = vpop.f32.mrb[0].mxu0
  %303 = vmatprep.mubr.f32.mxu0 0.0
  %304 = vmatmul.mubr.f32.gmra.mrb[0].mxu0 %v72
  %v305 = vpop.f32.mrb[0].mxu0
  %v306 = vadd.f32 %v97, %v305
  %v307 = vpop.f32.mrb[0].mxu0
  %308 = vmatprep.mubr.f32.mxu0 0.0
  %309 = vmatmul.mubr.f32.gmra.mrb[0].mxu0 %v73
  %v310 = vpop.f32.mrb[0].mxu0
  %v311 = vadd.f32 %v97, %v310
  %v312 = vpop.f32.mrb[0].mxu0
  %313 = vmatprep.mubr.f32.mxu0 0.0
  %314 = vmatmul.mubr.f32.gmra.mrb[0].mxu0 %v74
  %v315 = vpop.f32.mrb[0].mxu0
  %v316 = vadd.f32 %v97, %v315
  %v317 = vpop.f32.mrb[0].mxu0
  %318 = vmatprep.mubr.f32.mxu0 0.0
  %319 = vmatmul.mubr.f32.gmra.mrb[0].mxu0 %v75
  %v320 = vpop.f32.mrb[0].mxu0
  %v321 = vadd.f32 %v97, %v320
  %v322 = vpop.f32.mrb[0].mxu0
  %323 = vdwg.mxu0
  %vm324 = vcmp.gt.f32.partialorder %v166, 0.0
  %vm325 = vcmp.gt.f32.partialorder %v171, 0.0
  %vm326 = vcmp.gt.f32.partialorder %v176, 0.0
  %vm327 = vcmp.gt.f32.partialorder %v181, 0.0
  %vm328 = vcmp.gt.f32.partialorder %v186, 0.0
  %vm329 = vcmp.gt.f32.partialorder %v191, 0.0
  %vm330 = vcmp.gt.f32.partialorder %v196, 0.0
  %vm331 = vcmp.gt.f32.partialorder %v201, 0.0
  %vm332 = vcmp.gt.f32.partialorder %v206, 0.0
  %vm333 = vcmp.gt.f32.partialorder %v211, 0.0
  %vm334 = vcmp.gt.f32.partialorder %v216, 0.0
  %vm335 = vcmp.gt.f32.partialorder %v221, 0.0
  %vm336 = vcmp.gt.f32.partialorder %v226, 0.0
  %vm337 = vcmp.gt.f32.partialorder %v231, 0.0
  %vm338 = vcmp.gt.f32.partialorder %v236, 0.0
  %vm339 = vcmp.gt.f32.partialorder %v241, 0.0
  %vm340 = vcmp.gt.f32.partialorder %v246, 0.0
  %vm341 = vcmp.gt.f32.partialorder %v251, 0.0
  %vm342 = vcmp.gt.f32.partialorder %v256, 0.0
  %vm343 = vcmp.gt.f32.partialorder %v261, 0.0
  %vm344 = vcmp.gt.f32.partialorder %v266, 0.0
  %vm345 = vcmp.gt.f32.partialorder %v271, 0.0
  %vm346 = vcmp.gt.f32.partialorder %v276, 0.0
  %vm347 = vcmp.gt.f32.partialorder %v281, 0.0
  %vm348 = vcmp.gt.f32.partialorder %v286, 0.0
  %vm349 = vcmp.gt.f32.partialorder %v291, 0.0
  %vm350 = vcmp.gt.f32.partialorder %v296, 0.0
  %vm351 = vcmp.gt.f32.partialorder %v301, 0.0
  %vm352 = vcmp.gt.f32.partialorder %v306, 0.0
  %vm353 = vcmp.gt.f32.partialorder %v311, 0.0
  %vm354 = vcmp.gt.f32.partialorder %v316, 0.0
  %vm355 = vcmp.gt.f32.partialorder %v321, 0.0
  %v356 = vmul.f32 %v166, 0.01
  %v357 = vmul.f32 %v171, 0.01
  %v358 = vmul.f32 %v176, 0.01
  %v359 = vmul.f32 %v181, 0.01
  %v360 = vmul.f32 %v186, 0.01
  %v361 = vmul.f32 %v191, 0.01
  %v362 = vmul.f32 %v196, 0.01
  %v363 = vmul.f32 %v201, 0.01
  %v364 = vmul.f32 %v206, 0.01
  %v365 = vmul.f32 %v211, 0.01
  %v366 = vmul.f32 %v216, 0.01
  %v367 = vmul.f32 %v221, 0.01
  %v368 = vmul.f32 %v226, 0.01
  %v369 = vmul.f32 %v231, 0.01
  %v370 = vmul.f32 %v236, 0.01
  %v371 = vmul.f32 %v241, 0.01
  %v372 = vmul.f32 %v246, 0.01
  %v373 = vmul.f32 %v251, 0.01
  %v374 = vmul.f32 %v256, 0.01
  %v375 = vmul.f32 %v261, 0.01
  %v376 = vmul.f32 %v266, 0.01
  %v377 = vmul.f32 %v271, 0.01
  %v378 = vmul.f32 %v276, 0.01
  %v379 = vmul.f32 %v281, 0.01
  %v380 = vmul.f32 %v286, 0.01
  %v381 = vmul.f32 %v291, 0.01
  %v382 = vmul.f32 %v296, 0.01
  %v383 = vmul.f32 %v301, 0.01
  %v384 = vmul.f32 %v306, 0.01
  %v385 = vmul.f32 %v311, 0.01
  %v386 = vmul.f32 %v316, 0.01
  %v387 = vmul.f32 %v321, 0.01
  %v388 = vsel %vm324, %v166, %v356
  %v389 = vsel %vm325, %v171, %v357
  %v390 = vsel %vm326, %v176, %v358
  %v391 = vsel %vm327, %v181, %v359
  %v392 = vsel %vm328, %v186, %v360
  %v393 = vsel %vm329, %v191, %v361
  %v394 = vsel %vm330, %v196, %v362
  %v395 = vsel %vm331, %v201, %v363
  %v396 = vsel %vm332, %v206, %v364
  %v397 = vsel %vm333, %v211, %v365
  %v398 = vsel %vm334, %v216, %v366
  %v399 = vsel %vm335, %v221, %v367
  %v400 = vsel %vm336, %v226, %v368
  %v401 = vsel %vm337, %v231, %v369
  %v402 = vsel %vm338, %v236, %v370
  %v403 = vsel %vm339, %v241, %v371
  %v404 = vsel %vm340, %v246, %v372
  %v405 = vsel %vm341, %v251, %v373
  %v406 = vsel %vm342, %v256, %v374
  %v407 = vsel %vm343, %v261, %v375
  %v408 = vsel %vm344, %v266, %v376
  %v409 = vsel %vm345, %v271, %v377
  %v410 = vsel %vm346, %v276, %v378
  %v411 = vsel %vm347, %v281, %v379
  %v412 = vsel %vm348, %v286, %v380
  %v413 = vsel %vm349, %v291, %v381
  %v414 = vsel %vm350, %v296, %v382
  %v415 = vsel %vm351, %v301, %v383
  %v416 = vsel %vm352, %v306, %v384
  %v417 = vsel %vm353, %v311, %v385
  %v418 = vsel %vm354, %v316, %v386
  %v419 = vsel %vm355, %v321, %v387
  %v420 = vld [vmem:[%s3] sm:$0xff]
  %v421 = vld [vmem:[%s3 + $0x8] sm:$0xff]
  %v422 = vld [vmem:[%s3 + $0x10] sm:$0xff]
  %v423 = vld [vmem:[%s3 + $0x18] sm:$0xff]
  %v424 = vld [vmem:[%s3 + $0x20] sm:$0xff]
  %v425 = vld [vmem:[%s3 + $0x28] sm:$0xff]
  %v426 = vld [vmem:[%s3 + $0x30] sm:$0xff]
  %v427 = vld [vmem:[%s3 + $0x38] sm:$0xff]
  %v428 = vld [vmem:[%s4] sm:$0x1]
  %v430 = vlaneseq
  %v431 = vshrl.u32 %v430, 7
  %v432 = vsub.s32 0, %v431
  %v433 = vrot.slane %v428, %v432
  %vm435 = vcmask 523264
  %v437 = vsel %vm435, %v388, 0
  %v440 = vsel %vm435, %v389, 0
  %v443 = vsel %vm435, %v390, 0
  %v446 = vsel %vm435, %v391, 0
  %v449 = vsel %vm435, %v392, 0
  %v452 = vsel %vm435, %v393, 0
  %v455 = vsel %vm435, %v394, 0
  %v458 = vsel %vm435, %v395, 0
  %v461 = vsel %vm435, %v396, 0
  %v464 = vsel %vm435, %v397, 0
  %v467 = vsel %vm435, %v398, 0
  %v470 = vsel %vm435, %v399, 0
  %v473 = vsel %vm435, %v400, 0
  %v476 = vsel %vm435, %v401, 0
  %v479 = vsel %vm435, %v402, 0
  %v482 = vsel %vm435, %v403, 0
  %v485 = vsel %vm435, %v404, 0
  %v488 = vsel %vm435, %v405, 0
  %v491 = vsel %vm435, %v406, 0
  %v494 = vsel %vm435, %v407, 0
  %v497 = vsel %vm435, %v408, 0
  %v500 = vsel %vm435, %v409, 0
  %v503 = vsel %vm435, %v410, 0
  %v506 = vsel %vm435, %v411, 0
  %v509 = vsel %vm435, %v412, 0
  %v512 = vsel %vm435, %v413, 0
  %v515 = vsel %vm435, %v414, 0
  %v518 = vsel %vm435, %v415, 0
  %v521 = vsel %vm435, %v416, 0
  %v524 = vsel %vm435, %v417, 0
  %v527 = vsel %vm435, %v418, 0
  %v530 = vsel %vm435, %v419, 0
  %532 = vmatprep.subr.mxu0 0.0
  %533 = vmatpush1.msra.mxu0 %v420
  %534 = vmatprep.subr.mxu0 0.0
  %535 = vmatpush1.msra.mxu0 %v421
  %536 = vmatprep.subr.mxu0 0.0
  %537 = vmatpush1.msra.mxu0 %v422
  %538 = vmatprep.subr.mxu0 0.0
  %539 = vmatpush1.msra.mxu0 %v423
  %540 = vmatprep.subr.mxu0 0.0
  %541 = vmatpush1.msra.mxu0 %v424
  %542 = vmatprep.subr.mxu0 0.0
  %543 = vmatpush1.msra.mxu0 %v425
  %544 = vmatprep.subr.mxu0 0.0
  %545 = vmatpush1.msra.mxu0 %v426
  %546 = vmatprep.subr.mxu0 0.0
  %547 = vmatpush1.msra.mxu0 %v427
  %548 = vmatprep.subr.mxu0 0.0
  %549 = vmatpush1.msra.mxu0 0.0
  %550 = vmatprep.subr.mxu0 0.0
  %551 = vmatpush1.msra.mxu0 0.0
  %552 = vmatprep.subr.mxu0 0.0
  %553 = vmatpush1.msra.mxu0 0.0
  %554 = vmatprep.subr.mxu0 0.0
  %555 = vmatpush1.msra.mxu0 0.0
  %556 = vmatprep.subr.mxu0 0.0
  %557 = vmatpush1.msra.mxu0 0.0
  %558 = vmatprep.subr.mxu0 0.0
  %559 = vmatpush1.msra.mxu0 0.0
  %560 = vmatprep.subr.mxu0 0.0
  %561 = vmatpush1.msra.mxu0 0.0
  %562 = vmatprep.subr.mxu0 0.0
  %563 = vmatpush1.msra.mxu0 0.0
  %564 = vmatprep.subr.mxu0 0.0
  %565 = vmatpush1.msra.mxu0 0.0
  %566 = vmatprep.subr.mxu0 0.0
  %567 = vmatpush1.msra.mxu0 0.0
  %568 = vmatprep.subr.mxu0 0.0
  %569 = vmatpush1.msra.mxu0 0.0
  %570 = vmatprep.subr.mxu0 0.0
  %571 = vmatpush1.msra.mxu0 0.0
  %572 = vmatprep.subr.mxu0 0.0
  %573 = vmatpush1.msra.mxu0 0.0
  %574 = vmatprep.subr.mxu0 0.0
  %575 = vmatpush1.msra.mxu0 0.0
  %576 = vmatprep.subr.mxu0 0.0
  %577 = vmatpush1.msra.mxu0 0.0
  %578 = vmatprep.subr.mxu0 0.0
  %579 = vmatpush1.msra.mxu0 0.0
  %580 = vmatprep.subr.mxu0 0.0
  %581 = vmatpush1.msra.mxu0 0.0
  %582 = vmatprep.subr.mxu0 0.0
  %583 = vmatpush1.msra.mxu0 0.0
  %584 = vmatprep.subr.mxu0 0.0
  %585 = vmatpush1.msra.mxu0 0.0
  %586 = vmatprep.subr.mxu0 0.0
  %587 = vmatpush1.msra.mxu0 0.0
  %588 = vmatprep.subr.mxu0 0.0
  %589 = vmatpush1.msra.mxu0 0.0
  %590 = vmatprep.subr.mxu0 0.0
  %591 = vmatpush1.msra.mxu0 0.0
  %592 = vmatprep.subr.mxu0 0.0
  %593 = vmatpush1.msra.mxu0 0.0
  %594 = vmatprep.subr.mxu0 0.0
  %595 = vmatpush1.msra.mxu0 0.0
  %596 = vmatprep.mubr.f32.mxu0 0.0
  %597 = vmatmul.mubr.f32.gmra.mrb[0].mxu0 %v437
  %v598 = vpop.f32.mrb[0].mxu0
  %v599 = vadd.f32 %v433, %v598
  %v600 = vpop.f32.mrb[0].mxu0
  %601 = vmatprep.mubr.f32.mxu0 0.0
  %602 = vmatmul.mubr.f32.gmra.mrb[0].mxu0 %v440
  %v603 = vpop.f32.mrb[0].mxu0
  %v604 = vadd.f32 %v433, %v603
  %v605 = vpop.f32.mrb[0].mxu0
  %606 = vmatprep.mubr.f32.mxu0 0.0
  %607 = vmatmul.mubr.f32.gmra.mrb[0].mxu0 %v443
  %v608 = vpop.f32.mrb[0].mxu0
  %v609 = vadd.f32 %v433, %v608
  %v610 = vpop.f32.mrb[0].mxu0
  %611 = vmatprep.mubr.f32.mxu0 0.0
  %612 = vmatmul.mubr.f32.gmra.mrb[0].mxu0 %v446
  %v613 = vpop.f32.mrb[0].mxu0
  %v614 = vadd.f32 %v433, %v613
  %v615 = vpop.f32.mrb[0].mxu0
  %616 = vmatprep.mubr.f32.mxu0 0.0
  %617 = vmatmul.mubr.f32.gmra.mrb[0].mxu0 %v449
  %v618 = vpop.f32.mrb[0].mxu0
  %v619 = vadd.f32 %v433, %v618
  %v620 = vpop.f32.mrb[0].mxu0
  %621 = vmatprep.mubr.f32.mxu0 0.0
  %622 = vmatmul.mubr.f32.gmra.mrb[0].mxu0 %v452
  %v623 = vpop.f32.mrb[0].mxu0
  %v624 = vadd.f32 %v433, %v623
  %v625 = vpop.f32.mrb[0].mxu0
  %626 = vmatprep.mubr.f32.mxu0 0.0
  %627 = vmatmul.mubr.f32.gmra.mrb[0].mxu0 %v455
  %v628 = vpop.f32.mrb[0].mxu0
  %v629 = vadd.f32 %v433, %v628
  %v630 = vpop.f32.mrb[0].mxu0
  %631 = vmatprep.mubr.f32.mxu0 0.0
  %632 = vmatmul.mubr.f32.gmra.mrb[0].mxu0 %v458
  %v633 = vpop.f32.mrb[0].mxu0
  %v634 = vadd.f32 %v433, %v633
  %v635 = vpop.f32.mrb[0].mxu0
  %636 = vmatprep.mubr.f32.mxu0 0.0
  %637 = vmatmul.mubr.f32.gmra.mrb[0].mxu0 %v461
  %v638 = vpop.f32.mrb[0].mxu0
  %v639 = vadd.f32 %v433, %v638
  %v640 = vpop.f32.mrb[0].mxu0
  %641 = vmatprep.mubr.f32.mxu0 0.0
  %642 = vmatmul.mubr.f32.gmra.mrb[0].mxu0 %v464
  %v643 = vpop.f32.mrb[0].mxu0
  %v644 = vadd.f32 %v433, %v643
  %v645 = vpop.f32.mrb[0].mxu0
  %646 = vmatprep.mubr.f32.mxu0 0.0
  %647 = vmatmul.mubr.f32.gmra.mrb[0].mxu0 %v467
  %v648 = vpop.f32.mrb[0].mxu0
  %v649 = vadd.f32 %v433, %v648
  %v650 = vpop.f32.mrb[0].mxu0
  %651 = vmatprep.mubr.f32.mxu0 0.0
  %652 = vmatmul.mubr.f32.gmra.mrb[0].mxu0 %v470
  %v653 = vpop.f32.mrb[0].mxu0
  %v654 = vadd.f32 %v433, %v653
  %v655 = vpop.f32.mrb[0].mxu0
  %656 = vmatprep.mubr.f32.mxu0 0.0
  %657 = vmatmul.mubr.f32.gmra.mrb[0].mxu0 %v473
  %v658 = vpop.f32.mrb[0].mxu0
  %v659 = vadd.f32 %v433, %v658
  %v660 = vpop.f32.mrb[0].mxu0
  %661 = vmatprep.mubr.f32.mxu0 0.0
  %662 = vmatmul.mubr.f32.gmra.mrb[0].mxu0 %v476
  %v663 = vpop.f32.mrb[0].mxu0
  %v664 = vadd.f32 %v433, %v663
  %v665 = vpop.f32.mrb[0].mxu0
  %666 = vmatprep.mubr.f32.mxu0 0.0
  %667 = vmatmul.mubr.f32.gmra.mrb[0].mxu0 %v479
  %v668 = vpop.f32.mrb[0].mxu0
  %v669 = vadd.f32 %v433, %v668
  %v670 = vpop.f32.mrb[0].mxu0
  %671 = vmatprep.mubr.f32.mxu0 0.0
  %672 = vmatmul.mubr.f32.gmra.mrb[0].mxu0 %v482
  %v673 = vpop.f32.mrb[0].mxu0
  %v674 = vadd.f32 %v433, %v673
  %v675 = vpop.f32.mrb[0].mxu0
  %676 = vmatprep.mubr.f32.mxu0 0.0
  %677 = vmatmul.mubr.f32.gmra.mrb[0].mxu0 %v485
  %v678 = vpop.f32.mrb[0].mxu0
  %v679 = vadd.f32 %v433, %v678
  %v680 = vpop.f32.mrb[0].mxu0
  %681 = vmatprep.mubr.f32.mxu0 0.0
  %682 = vmatmul.mubr.f32.gmra.mrb[0].mxu0 %v488
  %v683 = vpop.f32.mrb[0].mxu0
  %v684 = vadd.f32 %v433, %v683
  %v685 = vpop.f32.mrb[0].mxu0
  %686 = vmatprep.mubr.f32.mxu0 0.0
  %687 = vmatmul.mubr.f32.gmra.mrb[0].mxu0 %v491
  %v688 = vpop.f32.mrb[0].mxu0
  %v689 = vadd.f32 %v433, %v688
  %v690 = vpop.f32.mrb[0].mxu0
  %691 = vmatprep.mubr.f32.mxu0 0.0
  %692 = vmatmul.mubr.f32.gmra.mrb[0].mxu0 %v494
  %v693 = vpop.f32.mrb[0].mxu0
  %v694 = vadd.f32 %v433, %v693
  %v695 = vpop.f32.mrb[0].mxu0
  %696 = vmatprep.mubr.f32.mxu0 0.0
  %697 = vmatmul.mubr.f32.gmra.mrb[0].mxu0 %v497
  %v698 = vpop.f32.mrb[0].mxu0
  %v699 = vadd.f32 %v433, %v698
  %v700 = vpop.f32.mrb[0].mxu0
  %701 = vmatprep.mubr.f32.mxu0 0.0
  %702 = vmatmul.mubr.f32.gmra.mrb[0].mxu0 %v500
  %v703 = vpop.f32.mrb[0].mxu0
  %v704 = vadd.f32 %v433, %v703
  %v705 = vpop.f32.mrb[0].mxu0
  %706 = vmatprep.mubr.f32.mxu0 0.0
  %707 = vmatmul.mubr.f32.gmra.mrb[0].mxu0 %v503
  %v708 = vpop.f32.mrb[0].mxu0
  %v709 = vadd.f32 %v433, %v708
  %v710 = vpop.f32.mrb[0].mxu0
  %711 = vmatprep.mubr.f32.mxu0 0.0
  %712 = vmatmul.mubr.f32.gmra.mrb[0].mxu0 %v506
  %v713 = vpop.f32.mrb[0].mxu0
  %v714 = vadd.f32 %v433, %v713
  %v715 = vpop.f32.mrb[0].mxu0
  %716 = vmatprep.mubr.f32.mxu0 0.0
  %717 = vmatmul.mubr.f32.gmra.mrb[0].mxu0 %v509
  %v718 = vpop.f32.mrb[0].mxu0
  %v719 = vadd.f32 %v433, %v718
  %v720 = vpop.f32.mrb[0].mxu0
  %721 = vmatprep.mubr.f32.mxu0 0.0
  %722 = vmatmul.mubr.f32.gmra.mrb[0].mxu0 %v512
  %v723 = vpop.f32.mrb[0].mxu0
  %v724 = vadd.f32 %v433, %v723
  %v725 = vpop.f32.mrb[0].mxu0
  %726 = vmatprep.mubr.f32.mxu0 0.0
  %727 = vmatmul.mubr.f32.gmra.mrb[0].mxu0 %v515
  %v728 = vpop.f32.mrb[0].mxu0
  %v729 = vadd.f32 %v433, %v728
  %v730 = vpop.f32.mrb[0].mxu0
  %731 = vmatprep.mubr.f32.mxu0 0.0
  %732 = vmatmul.mubr.f32.gmra.mrb[0].mxu0 %v518
  %v733 = vpop.f32.mrb[0].mxu0
  %v734 = vadd.f32 %v433, %v733
  %v735 = vpop.f32.mrb[0].mxu0
  %736 = vmatprep.mubr.f32.mxu0 0.0
  %737 = vmatmul.mubr.f32.gmra.mrb[0].mxu0 %v521
  %v738 = vpop.f32.mrb[0].mxu0
  %v739 = vadd.f32 %v433, %v738
  %v740 = vpop.f32.mrb[0].mxu0
  %741 = vmatprep.mubr.f32.mxu0 0.0
  %742 = vmatmul.mubr.f32.gmra.mrb[0].mxu0 %v524
  %v743 = vpop.f32.mrb[0].mxu0
  %v744 = vadd.f32 %v433, %v743
  %v745 = vpop.f32.mrb[0].mxu0
  %746 = vmatprep.mubr.f32.mxu0 0.0
  %747 = vmatmul.mubr.f32.gmra.mrb[0].mxu0 %v527
  %v748 = vpop.f32.mrb[0].mxu0
  %v749 = vadd.f32 %v433, %v748
  %v750 = vpop.f32.mrb[0].mxu0
  %751 = vmatprep.mubr.f32.mxu0 0.0
  %752 = vmatmul.mubr.f32.gmra.mrb[0].mxu0 %v530
  %v753 = vpop.f32.mrb[0].mxu0
  %v754 = vadd.f32 %v433, %v753
  %v755 = vpop.f32.mrb[0].mxu0
  %756 = vdwg.mxu0
  %vm757 = vcmp.gt.f32.partialorder %v599, 0.0
  %vm758 = vcmp.gt.f32.partialorder %v604, 0.0
  %vm759 = vcmp.gt.f32.partialorder %v609, 0.0
  %vm760 = vcmp.gt.f32.partialorder %v614, 0.0
  %vm761 = vcmp.gt.f32.partialorder %v619, 0.0
  %vm762 = vcmp.gt.f32.partialorder %v624, 0.0
  %vm763 = vcmp.gt.f32.partialorder %v629, 0.0
  %vm764 = vcmp.gt.f32.partialorder %v634, 0.0
  %vm765 = vcmp.gt.f32.partialorder %v639, 0.0
  %vm766 = vcmp.gt.f32.partialorder %v644, 0.0
  %vm767 = vcmp.gt.f32.partialorder %v649, 0.0
  %vm768 = vcmp.gt.f32.partialorder %v654, 0.0
  %vm769 = vcmp.gt.f32.partialorder %v659, 0.0
  %vm770 = vcmp.gt.f32.partialorder %v664, 0.0
  %vm771 = vcmp.gt.f32.partialorder %v669, 0.0
  %vm772 = vcmp.gt.f32.partialorder %v674, 0.0
  %vm773 = vcmp.gt.f32.partialorder %v679, 0.0
  %vm774 = vcmp.gt.f32.partialorder %v684, 0.0
  %vm775 = vcmp.gt.f32.partialorder %v689, 0.0
  %vm776 = vcmp.gt.f32.partialorder %v694, 0.0
  %vm777 = vcmp.gt.f32.partialorder %v699, 0.0
  %vm778 = vcmp.gt.f32.partialorder %v704, 0.0
  %vm779 = vcmp.gt.f32.partialorder %v709, 0.0
  %vm780 = vcmp.gt.f32.partialorder %v714, 0.0
  %vm781 = vcmp.gt.f32.partialorder %v719, 0.0
  %vm782 = vcmp.gt.f32.partialorder %v724, 0.0
  %vm783 = vcmp.gt.f32.partialorder %v729, 0.0
  %vm784 = vcmp.gt.f32.partialorder %v734, 0.0
  %vm785 = vcmp.gt.f32.partialorder %v739, 0.0
  %vm786 = vcmp.gt.f32.partialorder %v744, 0.0
  %vm787 = vcmp.gt.f32.partialorder %v749, 0.0
  %vm788 = vcmp.gt.f32.partialorder %v754, 0.0
  %v789 = vmul.f32 %v599, 0.01
  %v790 = vmul.f32 %v604, 0.01
  %v791 = vmul.f32 %v609, 0.01
  %v792 = vmul.f32 %v614, 0.01
  %v793 = vmul.f32 %v619, 0.01
  %v794 = vmul.f32 %v624, 0.01
  %v795 = vmul.f32 %v629, 0.01
  %v796 = vmul.f32 %v634, 0.01
  %v797 = vmul.f32 %v639, 0.01
  %v798 = vmul.f32 %v644, 0.01
  %v799 = vmul.f32 %v649, 0.01
  %v800 = vmul.f32 %v654, 0.01
  %v801 = vmul.f32 %v659, 0.01
  %v802 = vmul.f32 %v664, 0.01
  %v803 = vmul.f32 %v669, 0.01
  %v804 = vmul.f32 %v674, 0.01
  %v805 = vmul.f32 %v679, 0.01
  %v806 = vmul.f32 %v684, 0.01
  %v807 = vmul.f32 %v689, 0.01
  %v808 = vmul.f32 %v694, 0.01
  %v809 = vmul.f32 %v699, 0.01
  %v810 = vmul.f32 %v704, 0.01
  %v811 = vmul.f32 %v709, 0.01
  %v812 = vmul.f32 %v714, 0.01
  %v813 = vmul.f32 %v719, 0.01
  %v814 = vmul.f32 %v724, 0.01
  %v815 = vmul.f32 %v729, 0.01
  %v816 = vmul.f32 %v734, 0.01
  %v817 = vmul.f32 %v739, 0.01
  %v818 = vmul.f32 %v744, 0.01
  %v819 = vmul.f32 %v749, 0.01
  %v820 = vmul.f32 %v754, 0.01
  %v821 = vsel %vm757, %v599, %v789
  %v822 = vsel %vm758, %v604, %v790
  %v823 = vsel %vm759, %v609, %v791
  %v824 = vsel %vm760, %v614, %v792
  %v825 = vsel %vm761, %v619, %v793
  %v826 = vsel %vm762, %v624, %v794
  %v827 = vsel %vm763, %v629, %v795
  %v828 = vsel %vm764, %v634, %v796
  %v829 = vsel %vm765, %v639, %v797
  %v830 = vsel %vm766, %v644, %v798
  %v831 = vsel %vm767, %v649, %v799
  %v832 = vsel %vm768, %v654, %v800
  %v833 = vsel %vm769, %v659, %v801
  %v834 = vsel %vm770, %v664, %v802
  %v835 = vsel %vm771, %v669, %v803
  %v836 = vsel %vm772, %v674, %v804
  %v837 = vsel %vm773, %v679, %v805
  %v838 = vsel %vm774, %v684, %v806
  %v839 = vsel %vm775, %v689, %v807
  %v840 = vsel %vm776, %v694, %v808
  %v841 = vsel %vm777, %v699, %v809
  %v842 = vsel %vm778, %v704, %v810
  %v843 = vsel %vm779, %v709, %v811
  %v844 = vsel %vm780, %v714, %v812
  %v845 = vsel %vm781, %v719, %v813
  %v846 = vsel %vm782, %v724, %v814
  %v847 = vsel %vm783, %v729, %v815
  %v848 = vsel %vm784, %v734, %v816
  %v849 = vsel %vm785, %v739, %v817
  %v850 = vsel %vm786, %v744, %v818
  %v851 = vsel %vm787, %v749, %v819
  %v852 = vsel %vm788, %v754, %v820
  %v853 = vld [vmem:[%s5] sm:$0xff]
  %v854 = vld [vmem:[%s5 + $0x8] sm:$0xff]
  %v855 = vld [vmem:[%s5 + $0x10] sm:$0xff]
  %v856 = vld [vmem:[%s5 + $0x18] sm:$0xff]
  %v857 = vld [vmem:[%s5 + $0x20] sm:$0xff]
  %v858 = vld [vmem:[%s5 + $0x28] sm:$0xff]
  %v859 = vld [vmem:[%s5 + $0x30] sm:$0xff]
  %v860 = vld [vmem:[%s5 + $0x38] sm:$0xff]
  %v861 = vld [vmem:[%s5 + $0x40] sm:$0xff]
  %v862 = vld [vmem:[%s5 + $0x48] sm:$0xff]
  %v863 = vld [vmem:[%s5 + $0x50] sm:$0xff]
  %v864 = vld [vmem:[%s5 + $0x58] sm:$0xff]
  %v865 = vld [vmem:[%s5 + $0x60] sm:$0xff]
  %v866 = vld [vmem:[%s5 + $0x68] sm:$0xff]
  %v867 = vld [vmem:[%s5 + $0x70] sm:$0xff]
  %v868 = vld [vmem:[%s5 + $0x78] sm:$0xff]
  %v869 = vld [vmem:[%s5 + $0x80] sm:$0xff]
  %v870 = vld [vmem:[%s5 + $0x88] sm:$0xff]
  %v871 = vld [vmem:[%s5 + $0x90] sm:$0xff]
  %v872 = vld [vmem:[%s5 + $0x98] sm:$0xff]
  %v873 = vld [vmem:[%s5 + $0xa0] sm:$0xff]
  %v874 = vld [vmem:[%s5 + $0xa8] sm:$0xff]
  %v875 = vld [vmem:[%s5 + $0xb0] sm:$0xff]
  %v876 = vld [vmem:[%s5 + $0xb8] sm:$0xff]
  %v877 = vld [vmem:[%s5 + $0xc0] sm:$0xff]
  %v878 = vld [vmem:[%s5 + $0xc8] sm:$0xff]
  %v879 = vld [vmem:[%s5 + $0xd0] sm:$0xff]
  %v880 = vld [vmem:[%s5 + $0xd8] sm:$0xff]
  %v881 = vld [vmem:[%s5 + $0xe0] sm:$0xff]
  %v882 = vld [vmem:[%s5 + $0xe8] sm:$0xff]
  %v883 = vld [vmem:[%s5 + $0xf0] sm:$0xff]
  %v884 = vld [vmem:[%s5 + $0xf8] sm:$0xff]
  %v885 = vld [vmem:[%s6] sm:$0x3]
  %v887 = vlaneseq
  %v888 = vshrl.u32 %v887, 7
  %v889 = vsub.s32 0, %v888
  %v890 = vrot.slane %v885, %v889
  %v891 = vlaneseq
  %v892 = vshrl.u32 %v891, 7
  %v893 = vsub.s32 1, %v892
  %v894 = vrot.slane %v885, %v893
  %897 = vmatprep.subr.mxu0 %v854
  %898 = vmatpush1.msra.mxu0 %v853
  %899 = vmatprep.subr.mxu0 %v856
  %900 = vmatpush1.msra.mxu0 %v855
  %901 = vmatprep.subr.mxu0 %v858
  %902 = vmatpush1.msra.mxu0 %v857
  %903 = vmatprep.subr.mxu0 %v860
  %904 = vmatpush1.msra.mxu0 %v859
  %905 = vmatprep.subr.mxu0 %v862
  %906 = vmatpush1.msra.mxu0 %v861
  %907 = vmatprep.subr.mxu0 %v864
  %908 = vmatpush1.msra.mxu0 %v863
  %909 = vmatprep.subr.mxu0 %v866
  %910 = vmatpush1.msra.mxu0 %v865
  %911 = vmatprep.subr.mxu0 %v868
  %912 = vmatpush1.msra.mxu0 %v867
  %913 = vmatprep.subr.mxu0 %v870
  %914 = vmatpush1.msra.mxu0 %v869
  %915 = vmatprep.subr.mxu0 %v872
  %916 = vmatpush1.msra.mxu0 %v871
  %917 = vmatprep.subr.mxu0 %v874
  %918 = vmatpush1.msra.mxu0 %v873
  %919 = vmatprep.subr.mxu0 %v876
  %920 = vmatpush1.msra.mxu0 %v875
  %921 = vmatprep.subr.mxu0 %v878
  %922 = vmatpush1.msra.mxu0 %v877
  %923 = vmatprep.subr.mxu0 %v880
  %924 = vmatpush1.msra.mxu0 %v879
  %925 = vmatprep.subr.mxu0 %v882
  %926 = vmatpush1.msra.mxu0 %v881
  %927 = vmatprep.subr.mxu0 %v884
  %928 = vmatpush1.msra.mxu0 %v883
  %929 = vmatprep.subr.mxu0 0.0
  %930 = vmatpush1.msra.mxu0 0.0
  %931 = vmatprep.subr.mxu0 0.0
  %932 = vmatpush1.msra.mxu0 0.0
  %933 = vmatprep.subr.mxu0 0.0
  %934 = vmatpush1.msra.mxu0 0.0
  %935 = vmatprep.subr.mxu0 0.0
  %936 = vmatpush1.msra.mxu0 0.0
  %937 = vmatprep.subr.mxu0 0.0
  %938 = vmatpush1.msra.mxu0 0.0
  %939 = vmatprep.subr.mxu0 0.0
  %940 = vmatpush1.msra.mxu0 0.0
  %941 = vmatprep.subr.mxu0 0.0
  %942 = vmatpush1.msra.mxu0 0.0
  %943 = vmatprep.subr.mxu0 0.0
  %944 = vmatpush1.msra.mxu0 0.0
  %945 = vmatprep.subr.mxu0 0.0
  %946 = vmatpush1.msra.mxu0 0.0
  %947 = vmatprep.subr.mxu0 0.0
  %948 = vmatpush1.msra.mxu0 0.0
  %949 = vmatprep.subr.mxu0 0.0
  %950 = vmatpush1.msra.mxu0 0.0
  %951 = vmatprep.subr.mxu0 0.0
  %952 = vmatpush1.msra.mxu0 0.0
  %953 = vmatprep.subr.mxu0 0.0
  %954 = vmatpush1.msra.mxu0 0.0
  %955 = vmatprep.subr.mxu0 0.0
  %956 = vmatpush1.msra.mxu0 0.0
  %957 = vmatprep.subr.mxu0 0.0
  %958 = vmatpush1.msra.mxu0 0.0
  %959 = vmatprep.subr.mxu0 0.0
  %960 = vmatpush1.msra.mxu0 0.0
  %961 = vmatprep.mubr.f32.mxu0 0.0
  %962 = vmatmul.mubr.f32.gmra.mrb[0].mxu0 %v821
  %v963 = vpop.f32.mrb[0].mxu0
  %v964 = vadd.f32 %v890, %v963
  %v965 = vpop.f32.mrb[0].mxu0
  %v966 = vadd.f32 %v894, %v965
  %967 = vmatprep.mubr.f32.mxu0 0.0
  %968 = vmatmul.mubr.f32.gmra.mrb[0].mxu0 %v822
  %v969 = vpop.f32.mrb[0].mxu0
  %v970 = vadd.f32 %v890, %v969
  %v971 = vpop.f32.mrb[0].mxu0
  %v972 = vadd.f32 %v894, %v971
  %973 = vmatprep.mubr.f32.mxu0 0.0
  %974 = vmatmul.mubr.f32.gmra.mrb[0].mxu0 %v823
  %v975 = vpop.f32.mrb[0].mxu0
  %v976 = vadd.f32 %v890, %v975
  %v977 = vpop.f32.mrb[0].mxu0
  %v978 = vadd.f32 %v894, %v977
  %979 = vmatprep.mubr.f32.mxu0 0.0
  %980 = vmatmul.mubr.f32.gmra.mrb[0].mxu0 %v824
  %v981 = vpop.f32.mrb[0].mxu0
  %v982 = vadd.f32 %v890, %v981
  %v983 = vpop.f32.mrb[0].mxu0
  %v984 = vadd.f32 %v894, %v983
  %985 = vmatprep.mubr.f32.mxu0 0.0
  %986 = vmatmul.mubr.f32.gmra.mrb[0].mxu0 %v825
  %v987 = vpop.f32.mrb[0].mxu0
  %v988 = vadd.f32 %v890, %v987
  %v989 = vpop.f32.mrb[0].mxu0
  %v990 = vadd.f32 %v894, %v989
  %991 = vmatprep.mubr.f32.mxu0 0.0
  %992 = vmatmul.mubr.f32.gmra.mrb[0].mxu0 %v826
  %v993 = vpop.f32.mrb[0].mxu0
  %v994 = vadd.f32 %v890, %v993
  %v995 = vpop.f32.mrb[0].mxu0
  %v996 = vadd.f32 %v894, %v995
  %997 = vmatprep.mubr.f32.mxu0 0.0
  %998 = vmatmul.mubr.f32.gmra.mrb[0].mxu0 %v827
  %v999 = vpop.f32.mrb[0].mxu0
  %v1000 = vadd.f32 %v890, %v999
  %v1001 = vpop.f32.mrb[0].mxu0
  %v1002 = vadd.f32 %v894, %v1001
  %1003 = vmatprep.mubr.f32.mxu0 0.0
  %1004 = vmatmul.mubr.f32.gmra.mrb[0].mxu0 %v828
  %v1005 = vpop.f32.mrb[0].mxu0
  %v1006 = vadd.f32 %v890, %v1005
  %v1007 = vpop.f32.mrb[0].mxu0
  %v1008 = vadd.f32 %v894, %v1007
  %1009 = vmatprep.mubr.f32.mxu0 0.0
  %1010 = vmatmul.mubr.f32.gmra.mrb[0].mxu0 %v829
  %v1011 = vpop.f32.mrb[0].mxu0
  %v1012 = vadd.f32 %v890, %v1011
  %v1013 = vpop.f32.mrb[0].mxu0
  %v1014 = vadd.f32 %v894, %v1013
  %1015 = vmatprep.mubr.f32.mxu0 0.0
  %1016 = vmatmul.mubr.f32.gmra.mrb[0].mxu0 %v830
  %v1017 = vpop.f32.mrb[0].mxu0
  %v1018 = vadd.f32 %v890, %v1017
  %v1019 = vpop.f32.mrb[0].mxu0
  %v1020 = vadd.f32 %v894, %v1019
  %1021 = vmatprep.mubr.f32.mxu0 0.0
  %1022 = vmatmul.mubr.f32.gmra.mrb[0].mxu0 %v831
  %v1023 = vpop.f32.mrb[0].mxu0
  %v1024 = vadd.f32 %v890, %v1023
  %v1025 = vpop.f32.mrb[0].mxu0
  %v1026 = vadd.f32 %v894, %v1025
  %1027 = vmatprep.mubr.f32.mxu0 0.0
  %1028 = vmatmul.mubr.f32.gmra.mrb[0].mxu0 %v832
  %v1029 = vpop.f32.mrb[0].mxu0
  %v1030 = vadd.f32 %v890, %v1029
  %v1031 = vpop.f32.mrb[0].mxu0
  %v1032 = vadd.f32 %v894, %v1031
  %1033 = vmatprep.mubr.f32.mxu0 0.0
  %1034 = vmatmul.mubr.f32.gmra.mrb[0].mxu0 %v833
  %v1035 = vpop.f32.mrb[0].mxu0
  %v1036 = vadd.f32 %v890, %v1035
  %v1037 = vpop.f32.mrb[0].mxu0
  %v1038 = vadd.f32 %v894, %v1037
  %1039 = vmatprep.mubr.f32.mxu0 0.0
  %1040 = vmatmul.mubr.f32.gmra.mrb[0].mxu0 %v834
  %v1041 = vpop.f32.mrb[0].mxu0
  %v1042 = vadd.f32 %v890, %v1041
  %v1043 = vpop.f32.mrb[0].mxu0
  %v1044 = vadd.f32 %v894, %v1043
  %1045 = vmatprep.mubr.f32.mxu0 0.0
  %1046 = vmatmul.mubr.f32.gmra.mrb[0].mxu0 %v835
  %v1047 = vpop.f32.mrb[0].mxu0
  %v1048 = vadd.f32 %v890, %v1047
  %v1049 = vpop.f32.mrb[0].mxu0
  %v1050 = vadd.f32 %v894, %v1049
  %1051 = vmatprep.mubr.f32.mxu0 0.0
  %1052 = vmatmul.mubr.f32.gmra.mrb[0].mxu0 %v836
  %v1053 = vpop.f32.mrb[0].mxu0
  %v1054 = vadd.f32 %v890, %v1053
  %v1055 = vpop.f32.mrb[0].mxu0
  %v1056 = vadd.f32 %v894, %v1055
  %1057 = vmatprep.mubr.f32.mxu0 0.0
  %1058 = vmatmul.mubr.f32.gmra.mrb[0].mxu0 %v837
  %v1059 = vpop.f32.mrb[0].mxu0
  %v1060 = vadd.f32 %v890, %v1059
  %v1061 = vpop.f32.mrb[0].mxu0
  %v1062 = vadd.f32 %v894, %v1061
  %1063 = vmatprep.mubr.f32.mxu0 0.0
  %1064 = vmatmul.mubr.f32.gmra.mrb[0].mxu0 %v838
  %v1065 = vpop.f32.mrb[0].mxu0
  %v1066 = vadd.f32 %v890, %v1065
  %v1067 = vpop.f32.mrb[0].mxu0
  %v1068 = vadd.f32 %v894, %v1067
  %1069 = vmatprep.mubr.f32.mxu0 0.0
  %1070 = vmatmul.mubr.f32.gmra.mrb[0].mxu0 %v839
  %v1071 = vpop.f32.mrb[0].mxu0
  %v1072 = vadd.f32 %v890, %v1071
  %v1073 = vpop.f32.mrb[0].mxu0
  %v1074 = vadd.f32 %v894, %v1073
  %1075 = vmatprep.mubr.f32.mxu0 0.0
  %1076 = vmatmul.mubr.f32.gmra.mrb[0].mxu0 %v840
  %v1077 = vpop.f32.mrb[0].mxu0
  %v1078 = vadd.f32 %v890, %v1077
  %v1079 = vpop.f32.mrb[0].mxu0
  %v1080 = vadd.f32 %v894, %v1079
  %1081 = vmatprep.mubr.f32.mxu0 0.0
  %1082 = vmatmul.mubr.f32.gmra.mrb[0].mxu0 %v841
  %v1083 = vpop.f32.mrb[0].mxu0
  %v1084 = vadd.f32 %v890, %v1083
  %v1085 = vpop.f32.mrb[0].mxu0
  %v1086 = vadd.f32 %v894, %v1085
  %1087 = vmatprep.mubr.f32.mxu0 0.0
  %1088 = vmatmul.mubr.f32.gmra.mrb[0].mxu0 %v842
  %v1089 = vpop.f32.mrb[0].mxu0
  %v1090 = vadd.f32 %v890, %v1089
  %v1091 = vpop.f32.mrb[0].mxu0
  %v1092 = vadd.f32 %v894, %v1091
  %1093 = vmatprep.mubr.f32.mxu0 0.0
  %1094 = vmatmul.mubr.f32.gmra.mrb[0].mxu0 %v843
  %v1095 = vpop.f32.mrb[0].mxu0
  %v1096 = vadd.f32 %v890, %v1095
  %v1097 = vpop.f32.mrb[0].mxu0
  %v1098 = vadd.f32 %v894, %v1097
  %1099 = vmatprep.mubr.f32.mxu0 0.0
  %1100 = vmatmul.mubr.f32.gmra.mrb[0].mxu0 %v844
  %v1101 = vpop.f32.mrb[0].mxu0
  %v1102 = vadd.f32 %v890, %v1101
  %v1103 = vpop.f32.mrb[0].mxu0
  %v1104 = vadd.f32 %v894, %v1103
  %1105 = vmatprep.mubr.f32.mxu0 0.0
  %1106 = vmatmul.mubr.f32.gmra.mrb[0].mxu0 %v845
  %v1107 = vpop.f32.mrb[0].mxu0
  %v1108 = vadd.f32 %v890, %v1107
  %v1109 = vpop.f32.mrb[0].mxu0
  %v1110 = vadd.f32 %v894, %v1109
  %1111 = vmatprep.mubr.f32.mxu0 0.0
  %1112 = vmatmul.mubr.f32.gmra.mrb[0].mxu0 %v846
  %v1113 = vpop.f32.mrb[0].mxu0
  %v1114 = vadd.f32 %v890, %v1113
  %v1115 = vpop.f32.mrb[0].mxu0
  %v1116 = vadd.f32 %v894, %v1115
  %1117 = vmatprep.mubr.f32.mxu0 0.0
  %1118 = vmatmul.mubr.f32.gmra.mrb[0].mxu0 %v847
  %v1119 = vpop.f32.mrb[0].mxu0
  %v1120 = vadd.f32 %v890, %v1119
  %v1121 = vpop.f32.mrb[0].mxu0
  %v1122 = vadd.f32 %v894, %v1121
  %1123 = vmatprep.mubr.f32.mxu0 0.0
  %1124 = vmatmul.mubr.f32.gmra.mrb[0].mxu0 %v848
  %v1125 = vpop.f32.mrb[0].mxu0
  %v1126 = vadd.f32 %v890, %v1125
  %v1127 = vpop.f32.mrb[0].mxu0
  %v1128 = vadd.f32 %v894, %v1127
  %1129 = vmatprep.mubr.f32.mxu0 0.0
  %1130 = vmatmul.mubr.f32.gmra.mrb[0].mxu0 %v849
  %v1131 = vpop.f32.mrb[0].mxu0
  %v1132 = vadd.f32 %v890, %v1131
  %v1133 = vpop.f32.mrb[0].mxu0
  %v1134 = vadd.f32 %v894, %v1133
  %1135 = vmatprep.mubr.f32.mxu0 0.0
  %1136 = vmatmul.mubr.f32.gmra.mrb[0].mxu0 %v850
  %v1137 = vpop.f32.mrb[0].mxu0
  %v1138 = vadd.f32 %v890, %v1137
  %v1139 = vpop.f32.mrb[0].mxu0
  %v1140 = vadd.f32 %v894, %v1139
  %1141 = vmatprep.mubr.f32.mxu0 0.0
  %1142 = vmatmul.mubr.f32.gmra.mrb[0].mxu0 %v851
  %v1143 = vpop.f32.mrb[0].mxu0
  %v1144 = vadd.f32 %v890, %v1143
  %v1145 = vpop.f32.mrb[0].mxu0
  %v1146 = vadd.f32 %v894, %v1145
  %1147 = vmatprep.mubr.f32.mxu0 0.0
  %1148 = vmatmul.mubr.f32.gmra.mrb[0].mxu0 %v852
  %v1149 = vpop.f32.mrb[0].mxu0
  %v1150 = vadd.f32 %v890, %v1149
  %v1151 = vpop.f32.mrb[0].mxu0
  %v1152 = vadd.f32 %v894, %v1151
  %1153 = vdwg.mxu0
  %vm1154 = vcmp.gt.f32.partialorder %v964, 0.0
  %vm1155 = vcmp.gt.f32.partialorder %v966, 0.0
  %vm1156 = vcmp.gt.f32.partialorder %v970, 0.0
  %vm1157 = vcmp.gt.f32.partialorder %v972, 0.0
  %vm1158 = vcmp.gt.f32.partialorder %v976, 0.0
  %vm1159 = vcmp.gt.f32.partialorder %v978, 0.0
  %vm1160 = vcmp.gt.f32.partialorder %v982, 0.0
  %vm1161 = vcmp.gt.f32.partialorder %v984, 0.0
  %vm1162 = vcmp.gt.f32.partialorder %v988, 0.0
  %vm1163 = vcmp.gt.f32.partialorder %v990, 0.0
  %vm1164 = vcmp.gt.f32.partialorder %v994, 0.0
  %vm1165 = vcmp.gt.f32.partialorder %v996, 0.0
  %vm1166 = vcmp.gt.f32.partialorder %v1000, 0.0
  %vm1167 = vcmp.gt.f32.partialorder %v1002, 0.0
  %vm1168 = vcmp.gt.f32.partialorder %v1006, 0.0
  %vm1169 = vcmp.gt.f32.partialorder %v1008, 0.0
  %vm1170 = vcmp.gt.f32.partialorder %v1012, 0.0
  %vm1171 = vcmp.gt.f32.partialorder %v1014, 0.0
  %vm1172 = vcmp.gt.f32.partialorder %v1018, 0.0
  %vm1173 = vcmp.gt.f32.partialorder %v1020, 0.0
  %vm1174 = vcmp.gt.f32.partialorder %v1024, 0.0
  %vm1175 = vcmp.gt.f32.partialorder %v1026, 0.0
  %vm1176 = vcmp.gt.f32.partialorder %v1030, 0.0
  %vm1177 = vcmp.gt.f32.partialorder %v1032, 0.0
  %vm1178 = vcmp.gt.f32.partialorder %v1036, 0.0
  %vm1179 = vcmp.gt.f32.partialorder %v1038, 0.0
  %vm1180 = vcmp.gt.f32.partialorder %v1042, 0.0
  %vm1181 = vcmp.gt.f32.partialorder %v1044, 0.0
  %vm1182 = vcmp.gt.f32.partialorder %v1048, 0.0
  %vm1183 = vcmp.gt.f32.partialorder %v1050, 0.0
  %vm1184 = vcmp.gt.f32.partialorder %v1054, 0.0
  %vm1185 = vcmp.gt.f32.partialorder %v1056, 0.0
  %vm1186 = vcmp.gt.f32.partialorder %v1060, 0.0
  %vm1187 = vcmp.gt.f32.partialorder %v1062, 0.0
  %vm1188 = vcmp.gt.f32.partialorder %v1066, 0.0
  %vm1189 = vcmp.gt.f32.partialorder %v1068, 0.0
  %vm1190 = vcmp.gt.f32.partialorder %v1072, 0.0
  %vm1191 = vcmp.gt.f32.partialorder %v1074, 0.0
  %vm1192 = vcmp.gt.f32.partialorder %v1078, 0.0
  %vm1193 = vcmp.gt.f32.partialorder %v1080, 0.0
  %vm1194 = vcmp.gt.f32.partialorder %v1084, 0.0
  %vm1195 = vcmp.gt.f32.partialorder %v1086, 0.0
  %vm1196 = vcmp.gt.f32.partialorder %v1090, 0.0
  %vm1197 = vcmp.gt.f32.partialorder %v1092, 0.0
  %vm1198 = vcmp.gt.f32.partialorder %v1096, 0.0
  %vm1199 = vcmp.gt.f32.partialorder %v1098, 0.0
  %vm1200 = vcmp.gt.f32.partialorder %v1102, 0.0
  %vm1201 = vcmp.gt.f32.partialorder %v1104, 0.0
  %vm1202 = vcmp.gt.f32.partialorder %v1108, 0.0
  %vm1203 = vcmp.gt.f32.partialorder %v1110, 0.0
  %vm1204 = vcmp.gt.f32.partialorder %v1114, 0.0
  %vm1205 = vcmp.gt.f32.partialorder %v1116, 0.0
  %vm1206 = vcmp.gt.f32.partialorder %v1120, 0.0
  %vm1207 = vcmp.gt.f32.partialorder %v1122, 0.0
  %vm1208 = vcmp.gt.f32.partialorder %v1126, 0.0
  %vm1209 = vcmp.gt.f32.partialorder %v1128, 0.0
  %vm1210 = vcmp.gt.f32.partialorder %v1132, 0.0
  %vm1211 = vcmp.gt.f32.partialorder %v1134, 0.0
  %vm1212 = vcmp.gt.f32.partialorder %v1138, 0.0
  %vm1213 = vcmp.gt.f32.partialorder %v1140, 0.0
  %vm1214 = vcmp.gt.f32.partialorder %v1144, 0.0
  %vm1215 = vcmp.gt.f32.partialorder %v1146, 0.0
  %vm1216 = vcmp.gt.f32.partialorder %v1150, 0.0
  %vm1217 = vcmp.gt.f32.partialorder %v1152, 0.0
  %v1218 = vmul.f32 %v964, 0.01
  %v1219 = vmul.f32 %v966, 0.01
  %v1220 = vmul.f32 %v970, 0.01
  %v1221 = vmul.f32 %v972, 0.01
  %v1222 = vmul.f32 %v976, 0.01
  %v1223 = vmul.f32 %v978, 0.01
  %v1224 = vmul.f32 %v982, 0.01
  %v1225 = vmul.f32 %v984, 0.01
  %v1226 = vmul.f32 %v988, 0.01
  %v1227 = vmul.f32 %v990, 0.01
  %v1228 = vmul.f32 %v994, 0.01
  %v1229 = vmul.f32 %v996, 0.01
  %v1230 = vmul.f32 %v1000, 0.01
  %v1231 = vmul.f32 %v1002, 0.01
  %v1232 = vmul.f32 %v1006, 0.01
  %v1233 = vmul.f32 %v1008, 0.01
  %v1234 = vmul.f32 %v1012, 0.01
  %v1235 = vmul.f32 %v1014, 0.01
  %v1236 = vmul.f32 %v1018, 0.01
  %v1237 = vmul.f32 %v1020, 0.01
  %v1238 = vmul.f32 %v1024, 0.01
  %v1239 = vmul.f32 %v1026, 0.01
  %v1240 = vmul.f32 %v1030, 0.01
  %v1241 = vmul.f32 %v1032, 0.01
  %v1242 = vmul.f32 %v1036, 0.01
  %v1243 = vmul.f32 %v1038, 0.01
  %v1244 = vmul.f32 %v1042, 0.01
  %v1245 = vmul.f32 %v1044, 0.01
  %v1246 = vmul.f32 %v1048, 0.01
  %v1247 = vmul.f32 %v1050, 0.01
  %v1248 = vmul.f32 %v1054, 0.01
  %v1249 = vmul.f32 %v1056, 0.01
  %v1250 = vmul.f32 %v1060, 0.01
  %v1251 = vmul.f32 %v1062, 0.01
  %v1252 = vmul.f32 %v1066, 0.01
  %v1253 = vmul.f32 %v1068, 0.01
  %v1254 = vmul.f32 %v1072, 0.01
  %v1255 = vmul.f32 %v1074, 0.01
  %v1256 = vmul.f32 %v1078, 0.01
  %v1257 = vmul.f32 %v1080, 0.01
  %v1258 = vmul.f32 %v1084, 0.01
  %v1259 = vmul.f32 %v1086, 0.01
  %v1260 = vmul.f32 %v1090, 0.01
  %v1261 = vmul.f32 %v1092, 0.01
  %v1262 = vmul.f32 %v1096, 0.01
  %v1263 = vmul.f32 %v1098, 0.01
  %v1264 = vmul.f32 %v1102, 0.01
  %v1265 = vmul.f32 %v1104, 0.01
  %v1266 = vmul.f32 %v1108, 0.01
  %v1267 = vmul.f32 %v1110, 0.01
  %v1268 = vmul.f32 %v1114, 0.01
  %v1269 = vmul.f32 %v1116, 0.01
  %v1270 = vmul.f32 %v1120, 0.01
  %v1271 = vmul.f32 %v1122, 0.01
  %v1272 = vmul.f32 %v1126, 0.01
  %v1273 = vmul.f32 %v1128, 0.01
  %v1274 = vmul.f32 %v1132, 0.01
  %v1275 = vmul.f32 %v1134, 0.01
  %v1276 = vmul.f32 %v1138, 0.01
  %v1277 = vmul.f32 %v1140, 0.01
  %v1278 = vmul.f32 %v1144, 0.01
  %v1279 = vmul.f32 %v1146, 0.01
  %v1280 = vmul.f32 %v1150, 0.01
  %v1281 = vmul.f32 %v1152, 0.01
  %v1282 = vsel %vm1154, %v964, %v1218
  %v1283 = vsel %vm1155, %v966, %v1219
  %v1284 = vsel %vm1156, %v970, %v1220
  %v1285 = vsel %vm1157, %v972, %v1221
  %v1286 = vsel %vm1158, %v976, %v1222
  %v1287 = vsel %vm1159, %v978, %v1223
  %v1288 = vsel %vm1160, %v982, %v1224
  %v1289 = vsel %vm1161, %v984, %v1225
  %v1290 = vsel %vm1162, %v988, %v1226
  %v1291 = vsel %vm1163, %v990, %v1227
  %v1292 = vsel %vm1164, %v994, %v1228
  %v1293 = vsel %vm1165, %v996, %v1229
  %v1294 = vsel %vm1166, %v1000, %v1230
  %v1295 = vsel %vm1167, %v1002, %v1231
  %v1296 = vsel %vm1168, %v1006, %v1232
  %v1297 = vsel %vm1169, %v1008, %v1233
  %v1298 = vsel %vm1170, %v1012, %v1234
  %v1299 = vsel %vm1171, %v1014, %v1235
  %v1300 = vsel %vm1172, %v1018, %v1236
  %v1301 = vsel %vm1173, %v1020, %v1237
  %v1302 = vsel %vm1174, %v1024, %v1238
  %v1303 = vsel %vm1175, %v1026, %v1239
  %v1304 = vsel %vm1176, %v1030, %v1240
  %v1305 = vsel %vm1177, %v1032, %v1241
  %v1306 = vsel %vm1178, %v1036, %v1242
  %v1307 = vsel %vm1179, %v1038, %v1243
  %v1308 = vsel %vm1180, %v1042, %v1244
  %v1309 = vsel %vm1181, %v1044, %v1245
  %v1310 = vsel %vm1182, %v1048, %v1246
  %v1311 = vsel %vm1183, %v1050, %v1247
  %v1312 = vsel %vm1184, %v1054, %v1248
  %v1313 = vsel %vm1185, %v1056, %v1249
  %v1314 = vsel %vm1186, %v1060, %v1250
  %v1315 = vsel %vm1187, %v1062, %v1251
  %v1316 = vsel %vm1188, %v1066, %v1252
  %v1317 = vsel %vm1189, %v1068, %v1253
  %v1318 = vsel %vm1190, %v1072, %v1254
  %v1319 = vsel %vm1191, %v1074, %v1255
  %v1320 = vsel %vm1192, %v1078, %v1256
  %v1321 = vsel %vm1193, %v1080, %v1257
  %v1322 = vsel %vm1194, %v1084, %v1258
  %v1323 = vsel %vm1195, %v1086, %v1259
  %v1324 = vsel %vm1196, %v1090, %v1260
  %v1325 = vsel %vm1197, %v1092, %v1261
  %v1326 = vsel %vm1198, %v1096, %v1262
  %v1327 = vsel %vm1199, %v1098, %v1263
  %v1328 = vsel %vm1200, %v1102, %v1264
  %v1329 = vsel %vm1201, %v1104, %v1265
  %v1330 = vsel %vm1202, %v1108, %v1266
  %v1331 = vsel %vm1203, %v1110, %v1267
  %v1332 = vsel %vm1204, %v1114, %v1268
  %v1333 = vsel %vm1205, %v1116, %v1269
  %v1334 = vsel %vm1206, %v1120, %v1270
  %v1335 = vsel %vm1207, %v1122, %v1271
  %v1336 = vsel %vm1208, %v1126, %v1272
  %v1337 = vsel %vm1209, %v1128, %v1273
  %v1338 = vsel %vm1210, %v1132, %v1274
  %v1339 = vsel %vm1211, %v1134, %v1275
  %v1340 = vsel %vm1212, %v1138, %v1276
  %v1341 = vsel %vm1213, %v1140, %v1277
  %v1342 = vsel %vm1214, %v1144, %v1278
  %v1343 = vsel %vm1215, %v1146, %v1279
  %v1344 = vsel %vm1216, %v1150, %v1280
  %v1345 = vsel %vm1217, %v1152, %v1281
  %v1346 = vld [vmem:[%s7] sm:$0xff]
  %v1347 = vld [vmem:[%s7 + $0x8] sm:$0xff]
  %v1348 = vld [vmem:[%s7 + $0x10] sm:$0xff]
  %v1349 = vld [vmem:[%s7 + $0x18] sm:$0xff]
  %v1350 = vld [vmem:[%s7 + $0x20] sm:$0xff]
  %v1351 = vld [vmem:[%s7 + $0x28] sm:$0xff]
  %v1352 = vld [vmem:[%s7 + $0x30] sm:$0xff]
  %v1353 = vld [vmem:[%s7 + $0x38] sm:$0xff]
  %v1354 = vld [vmem:[%s7 + $0x40] sm:$0xff]
  %v1355 = vld [vmem:[%s7 + $0x48] sm:$0xff]
  %v1356 = vld [vmem:[%s7 + $0x50] sm:$0xff]
  %v1357 = vld [vmem:[%s7 + $0x58] sm:$0xff]
  %v1358 = vld [vmem:[%s7 + $0x60] sm:$0xff]
  %v1359 = vld [vmem:[%s7 + $0x68] sm:$0xff]
  %v1360 = vld [vmem:[%s7 + $0x70] sm:$0xff]
  %v1361 = vld [vmem:[%s7 + $0x78] sm:$0xff]
  %v1362 = vld [vmem:[%s7 + $0x80] sm:$0xff]
  %v1363 = vld [vmem:[%s7 + $0x88] sm:$0xff]
  %v1364 = vld [vmem:[%s7 + $0x90] sm:$0xff]
  %v1365 = vld [vmem:[%s7 + $0x98] sm:$0xff]
  %v1366 = vld [vmem:[%s7 + $0xa0] sm:$0xff]
  %v1367 = vld [vmem:[%s7 + $0xa8] sm:$0xff]
  %v1368 = vld [vmem:[%s7 + $0xb0] sm:$0xff]
  %v1369 = vld [vmem:[%s7 + $0xb8] sm:$0xff]
  %v1370 = vld [vmem:[%s7 + $0xc0] sm:$0xff]
  %v1371 = vld [vmem:[%s7 + $0xc8] sm:$0xff]
  %v1372 = vld [vmem:[%s7 + $0xd0] sm:$0xff]
  %v1373 = vld [vmem:[%s7 + $0xd8] sm:$0xff]
  %v1374 = vld [vmem:[%s7 + $0xe0] sm:$0xff]
  %v1375 = vld [vmem:[%s7 + $0xe8] sm:$0xff]
  %v1376 = vld [vmem:[%s7 + $0xf0] sm:$0xff]
  %v1377 = vld [vmem:[%s7 + $0xf8] sm:$0xff]
  %v1378 = vld [vmem:[%s8] sm:$0x1]
  %v1380 = vlaneseq
  %v1381 = vshrl.u32 %v1380, 7
  %v1382 = vsub.s32 0, %v1381
  %v1383 = vrot.slane %v1378, %v1382
  %1385 = vmatprep.subr.mxu0 0.0
  %1386 = vmatpush1.msra.mxu0 %v1346
  %1387 = vmatprep.subr.mxu0 0.0
  %1388 = vmatpush1.msra.mxu0 %v1347
  %1389 = vmatprep.subr.mxu0 0.0
  %1390 = vmatpush1.msra.mxu0 %v1348
  %1391 = vmatprep.subr.mxu0 0.0
  %1392 = vmatpush1.msra.mxu0 %v1349
  %1393 = vmatprep.subr.mxu0 0.0
  %1394 = vmatpush1.msra.mxu0 %v1350
  %1395 = vmatprep.subr.mxu0 0.0
  %1396 = vmatpush1.msra.mxu0 %v1351
  %1397 = vmatprep.subr.mxu0 0.0
  %1398 = vmatpush1.msra.mxu0 %v1352
  %1399 = vmatprep.subr.mxu0 0.0
  %1400 = vmatpush1.msra.mxu0 %v1353
  %1401 = vmatprep.subr.mxu0 0.0
  %1402 = vmatpush1.msra.mxu0 %v1354
  %1403 = vmatprep.subr.mxu0 0.0
  %1404 = vmatpush1.msra.mxu0 %v1355
  %1405 = vmatprep.subr.mxu0 0.0
  %1406 = vmatpush1.msra.mxu0 %v1356
  %1407 = vmatprep.subr.mxu0 0.0
  %1408 = vmatpush1.msra.mxu0 %v1357
  %1409 = vmatprep.subr.mxu0 0.0
  %1410 = vmatpush1.msra.mxu0 %v1358
  %1411 = vmatprep.subr.mxu0 0.0
  %1412 = vmatpush1.msra.mxu0 %v1359
  %1413 = vmatprep.subr.mxu0 0.0
  %1414 = vmatpush1.msra.mxu0 %v1360
  %1415 = vmatprep.subr.mxu0 0.0
  %1416 = vmatpush1.msra.mxu0 %v1361
  %1417 = vmatprep.subr.mxu0 0.0
  %1418 = vmatpush1.msra.mxu0 %v1362
  %1419 = vmatprep.subr.mxu0 0.0
  %1420 = vmatpush1.msra.mxu0 %v1363
  %1421 = vmatprep.subr.mxu0 0.0
  %1422 = vmatpush1.msra.mxu0 %v1364
  %1423 = vmatprep.subr.mxu0 0.0
  %1424 = vmatpush1.msra.mxu0 %v1365
  %1425 = vmatprep.subr.mxu0 0.0
  %1426 = vmatpush1.msra.mxu0 %v1366
  %1427 = vmatprep.subr.mxu0 0.0
  %1428 = vmatpush1.msra.mxu0 %v1367
  %1429 = vmatprep.subr.mxu0 0.0
  %1430 = vmatpush1.msra.mxu0 %v1368
  %1431 = vmatprep.subr.mxu0 0.0
  %1432 = vmatpush1.msra.mxu0 %v1369
  %1433 = vmatprep.subr.mxu0 0.0
  %1434 = vmatpush1.msra.mxu0 %v1370
  %1435 = vmatprep.subr.mxu0 0.0
  %1436 = vmatpush1.msra.mxu0 %v1371
  %1437 = vmatprep.subr.mxu0 0.0
  %1438 = vmatpush1.msra.mxu0 %v1372
  %1439 = vmatprep.subr.mxu0 0.0
  %1440 = vmatpush1.msra.mxu0 %v1373
  %1441 = vmatprep.subr.mxu0 0.0
  %1442 = vmatpush1.msra.mxu0 %v1374
  %1443 = vmatprep.subr.mxu0 0.0
  %1444 = vmatpush1.msra.mxu0 %v1375
  %1445 = vmatprep.subr.mxu0 0.0
  %1446 = vmatpush1.msra.mxu0 %v1376
  %1447 = vmatprep.subr.mxu0 0.0
  %1448 = vmatpush1.msra.mxu0 %v1377
  %1449 = vmatprep.mubr.f32.mxu0 %v1283
  %1450 = vmatmul.mubr.f32.gmra.mrb[0].mxu0 %v1282
  %v1451 = vpop.f32.mrb[0].mxu0
  %v1452 = vadd.f32 %v1383, %v1451
  %v1453 = vpop.f32.mrb[0].mxu0
  %1454 = vmatprep.mubr.f32.mxu0 %v1285
  %1455 = vmatmul.mubr.f32.gmra.mrb[0].mxu0 %v1284
  %v1456 = vpop.f32.mrb[0].mxu0
  %v1457 = vadd.f32 %v1383, %v1456
  %v1458 = vpop.f32.mrb[0].mxu0
  %1459 = vmatprep.mubr.f32.mxu0 %v1287
  %1460 = vmatmul.mubr.f32.gmra.mrb[0].mxu0 %v1286
  %v1461 = vpop.f32.mrb[0].mxu0
  %v1462 = vadd.f32 %v1383, %v1461
  %v1463 = vpop.f32.mrb[0].mxu0
  %1464 = vmatprep.mubr.f32.mxu0 %v1289
  %1465 = vmatmul.mubr.f32.gmra.mrb[0].mxu0 %v1288
  %v1466 = vpop.f32.mrb[0].mxu0
  %v1467 = vadd.f32 %v1383, %v1466
  %v1468 = vpop.f32.mrb[0].mxu0
  %1469 = vmatprep.mubr.f32.mxu0 %v1291
  %1470 = vmatmul.mubr.f32.gmra.mrb[0].mxu0 %v1290
  %v1471 = vpop.f32.mrb[0].mxu0
  %v1472 = vadd.f32 %v1383, %v1471
  %v1473 = vpop.f32.mrb[0].mxu0
  %1474 = vmatprep.mubr.f32.mxu0 %v1293
  %1475 = vmatmul.mubr.f32.gmra.mrb[0].mxu0 %v1292
  %v1476 = vpop.f32.mrb[0].mxu0
  %v1477 = vadd.f32 %v1383, %v1476
  %v1478 = vpop.f32.mrb[0].mxu0
  %1479 = vmatprep.mubr.f32.mxu0 %v1295
  %1480 = vmatmul.mubr.f32.gmra.mrb[0].mxu0 %v1294
  %v1481 = vpop.f32.mrb[0].mxu0
  %v1482 = vadd.f32 %v1383, %v1481
  %v1483 = vpop.f32.mrb[0].mxu0
  %1484 = vmatprep.mubr.f32.mxu0 %v1297
  %1485 = vmatmul.mubr.f32.gmra.mrb[0].mxu0 %v1296
  %v1486 = vpop.f32.mrb[0].mxu0
  %v1487 = vadd.f32 %v1383, %v1486
  %v1488 = vpop.f32.mrb[0].mxu0
  %1489 = vmatprep.mubr.f32.mxu0 %v1299
  %1490 = vmatmul.mubr.f32.gmra.mrb[0].mxu0 %v1298
  %v1491 = vpop.f32.mrb[0].mxu0
  %v1492 = vadd.f32 %v1383, %v1491
  %v1493 = vpop.f32.mrb[0].mxu0
  %1494 = vmatprep.mubr.f32.mxu0 %v1301
  %1495 = vmatmul.mubr.f32.gmra.mrb[0].mxu0 %v1300
  %v1496 = vpop.f32.mrb[0].mxu0
  %v1497 = vadd.f32 %v1383, %v1496
  %v1498 = vpop.f32.mrb[0].mxu0
  %1499 = vmatprep.mubr.f32.mxu0 %v1303
  %1500 = vmatmul.mubr.f32.gmra.mrb[0].mxu0 %v1302
  %v1501 = vpop.f32.mrb[0].mxu0
  %v1502 = vadd.f32 %v1383, %v1501
  %v1503 = vpop.f32.mrb[0].mxu0
  %1504 = vmatprep.mubr.f32.mxu0 %v1305
  %1505 = vmatmul.mubr.f32.gmra.mrb[0].mxu0 %v1304
  %v1506 = vpop.f32.mrb[0].mxu0
  %v1507 = vadd.f32 %v1383, %v1506
  %v1508 = vpop.f32.mrb[0].mxu0
  %1509 = vmatprep.mubr.f32.mxu0 %v1307
  %1510 = vmatmul.mubr.f32.gmra.mrb[0].mxu0 %v1306
  %v1511 = vpop.f32.mrb[0].mxu0
  %v1512 = vadd.f32 %v1383, %v1511
  %v1513 = vpop.f32.mrb[0].mxu0
  %1514 = vmatprep.mubr.f32.mxu0 %v1309
  %1515 = vmatmul.mubr.f32.gmra.mrb[0].mxu0 %v1308
  %v1516 = vpop.f32.mrb[0].mxu0
  %v1517 = vadd.f32 %v1383, %v1516
  %v1518 = vpop.f32.mrb[0].mxu0
  %1519 = vmatprep.mubr.f32.mxu0 %v1311
  %1520 = vmatmul.mubr.f32.gmra.mrb[0].mxu0 %v1310
  %v1521 = vpop.f32.mrb[0].mxu0
  %v1522 = vadd.f32 %v1383, %v1521
  %v1523 = vpop.f32.mrb[0].mxu0
  %1524 = vmatprep.mubr.f32.mxu0 %v1313
  %1525 = vmatmul.mubr.f32.gmra.mrb[0].mxu0 %v1312
  %v1526 = vpop.f32.mrb[0].mxu0
  %v1527 = vadd.f32 %v1383, %v1526
  %v1528 = vpop.f32.mrb[0].mxu0
  %1529 = vmatprep.mubr.f32.mxu0 %v1315
  %1530 = vmatmul.mubr.f32.gmra.mrb[0].mxu0 %v1314
  %v1531 = vpop.f32.mrb[0].mxu0
  %v1532 = vadd.f32 %v1383, %v1531
  %v1533 = vpop.f32.mrb[0].mxu0
  %1534 = vmatprep.mubr.f32.mxu0 %v1317
  %1535 = vmatmul.mubr.f32.gmra.mrb[0].mxu0 %v1316
  %v1536 = vpop.f32.mrb[0].mxu0
  %v1537 = vadd.f32 %v1383, %v1536
  %v1538 = vpop.f32.mrb[0].mxu0
  %1539 = vmatprep.mubr.f32.mxu0 %v1319
  %1540 = vmatmul.mubr.f32.gmra.mrb[0].mxu0 %v1318
  %v1541 = vpop.f32.mrb[0].mxu0
  %v1542 = vadd.f32 %v1383, %v1541
  %v1543 = vpop.f32.mrb[0].mxu0
  %1544 = vmatprep.mubr.f32.mxu0 %v1321
  %1545 = vmatmul.mubr.f32.gmra.mrb[0].mxu0 %v1320
  %v1546 = vpop.f32.mrb[0].mxu0
  %v1547 = vadd.f32 %v1383, %v1546
  %v1548 = vpop.f32.mrb[0].mxu0
  %1549 = vmatprep.mubr.f32.mxu0 %v1323
  %1550 = vmatmul.mubr.f32.gmra.mrb[0].mxu0 %v1322
  %v1551 = vpop.f32.mrb[0].mxu0
  %v1552 = vadd.f32 %v1383, %v1551
  %v1553 = vpop.f32.mrb[0].mxu0
  %1554 = vmatprep.mubr.f32.mxu0 %v1325
  %1555 = vmatmul.mubr.f32.gmra.mrb[0].mxu0 %v1324
  %v1556 = vpop.f32.mrb[0].mxu0
  %v1557 = vadd.f32 %v1383, %v1556
  %v1558 = vpop.f32.mrb[0].mxu0
  %1559 = vmatprep.mubr.f32.mxu0 %v1327
  %1560 = vmatmul.mubr.f32.gmra.mrb[0].mxu0 %v1326
  %v1561 = vpop.f32.mrb[0].mxu0
  %v1562 = vadd.f32 %v1383, %v1561
  %v1563 = vpop.f32.mrb[0].mxu0
  %1564 = vmatprep.mubr.f32.mxu0 %v1329
  %1565 = vmatmul.mubr.f32.gmra.mrb[0].mxu0 %v1328
  %v1566 = vpop.f32.mrb[0].mxu0
  %v1567 = vadd.f32 %v1383, %v1566
  %v1568 = vpop.f32.mrb[0].mxu0
  %1569 = vmatprep.mubr.f32.mxu0 %v1331
  %1570 = vmatmul.mubr.f32.gmra.mrb[0].mxu0 %v1330
  %v1571 = vpop.f32.mrb[0].mxu0
  %v1572 = vadd.f32 %v1383, %v1571
  %v1573 = vpop.f32.mrb[0].mxu0
  %1574 = vmatprep.mubr.f32.mxu0 %v1333
  %1575 = vmatmul.mubr.f32.gmra.mrb[0].mxu0 %v1332
  %v1576 = vpop.f32.mrb[0].mxu0
  %v1577 = vadd.f32 %v1383, %v1576
  %v1578 = vpop.f32.mrb[0].mxu0
  %1579 = vmatprep.mubr.f32.mxu0 %v1335
  %1580 = vmatmul.mubr.f32.gmra.mrb[0].mxu0 %v1334
  %v1581 = vpop.f32.mrb[0].mxu0
  %v1582 = vadd.f32 %v1383, %v1581
  %v1583 = vpop.f32.mrb[0].mxu0
  %1584 = vmatprep.mubr.f32.mxu0 %v1337
  %1585 = vmatmul.mubr.f32.gmra.mrb[0].mxu0 %v1336
  %v1586 = vpop.f32.mrb[0].mxu0
  %v1587 = vadd.f32 %v1383, %v1586
  %v1588 = vpop.f32.mrb[0].mxu0
  %1589 = vmatprep.mubr.f32.mxu0 %v1339
  %1590 = vmatmul.mubr.f32.gmra.mrb[0].mxu0 %v1338
  %v1591 = vpop.f32.mrb[0].mxu0
  %v1592 = vadd.f32 %v1383, %v1591
  %v1593 = vpop.f32.mrb[0].mxu0
  %1594 = vmatprep.mubr.f32.mxu0 %v1341
  %1595 = vmatmul.mubr.f32.gmra.mrb[0].mxu0 %v1340
  %v1596 = vpop.f32.mrb[0].mxu0
  %v1597 = vadd.f32 %v1383, %v1596
  %v1598 = vpop.f32.mrb[0].mxu0
  %1599 = vmatprep.mubr.f32.mxu0 %v1343
  %1600 = vmatmul.mubr.f32.gmra.mrb[0].mxu0 %v1342
  %v1601 = vpop.f32.mrb[0].mxu0
  %v1602 = vadd.f32 %v1383, %v1601
  %v1603 = vpop.f32.mrb[0].mxu0
  %1604 = vmatprep.mubr.f32.mxu0 %v1345
  %1605 = vmatmul.mubr.f32.gmra.mrb[0].mxu0 %v1344
  %v1606 = vpop.f32.mrb[0].mxu0
  %v1607 = vadd.f32 %v1383, %v1606
  %v1608 = vpop.f32.mrb[0].mxu0
  %1609 = vdwg.mxu0
  %vm1610 = vcmp.gt.f32.partialorder %v1452, 0.0
  %vm1611 = vcmp.gt.f32.partialorder %v1457, 0.0
  %vm1612 = vcmp.gt.f32.partialorder %v1462, 0.0
  %vm1613 = vcmp.gt.f32.partialorder %v1467, 0.0
  %vm1614 = vcmp.gt.f32.partialorder %v1472, 0.0
  %vm1615 = vcmp.gt.f32.partialorder %v1477, 0.0
  %vm1616 = vcmp.gt.f32.partialorder %v1482, 0.0
  %vm1617 = vcmp.gt.f32.partialorder %v1487, 0.0
  %vm1618 = vcmp.gt.f32.partialorder %v1492, 0.0
  %vm1619 = vcmp.gt.f32.partialorder %v1497, 0.0
  %vm1620 = vcmp.gt.f32.partialorder %v1502, 0.0
  %vm1621 = vcmp.gt.f32.partialorder %v1507, 0.0
  %vm1622 = vcmp.gt.f32.partialorder %v1512, 0.0
  %vm1623 = vcmp.gt.f32.partialorder %v1517, 0.0
  %vm1624 = vcmp.gt.f32.partialorder %v1522, 0.0
  %vm1625 = vcmp.gt.f32.partialorder %v1527, 0.0
  %vm1626 = vcmp.gt.f32.partialorder %v1532, 0.0
  %vm1627 = vcmp.gt.f32.partialorder %v1537, 0.0
  %vm1628 = vcmp.gt.f32.partialorder %v1542, 0.0
  %vm1629 = vcmp.gt.f32.partialorder %v1547, 0.0
  %vm1630 = vcmp.gt.f32.partialorder %v1552, 0.0
  %vm1631 = vcmp.gt.f32.partialorder %v1557, 0.0
  %vm1632 = vcmp.gt.f32.partialorder %v1562, 0.0
  %vm1633 = vcmp.gt.f32.partialorder %v1567, 0.0
  %vm1634 = vcmp.gt.f32.partialorder %v1572, 0.0
  %vm1635 = vcmp.gt.f32.partialorder %v1577, 0.0
  %vm1636 = vcmp.gt.f32.partialorder %v1582, 0.0
  %vm1637 = vcmp.gt.f32.partialorder %v1587, 0.0
  %vm1638 = vcmp.gt.f32.partialorder %v1592, 0.0
  %vm1639 = vcmp.gt.f32.partialorder %v1597, 0.0
  %vm1640 = vcmp.gt.f32.partialorder %v1602, 0.0
  %vm1641 = vcmp.gt.f32.partialorder %v1607, 0.0
  %v1642 = vmul.f32 %v1452, 0.01
  %v1643 = vmul.f32 %v1457, 0.01
  %v1644 = vmul.f32 %v1462, 0.01
  %v1645 = vmul.f32 %v1467, 0.01
  %v1646 = vmul.f32 %v1472, 0.01
  %v1647 = vmul.f32 %v1477, 0.01
  %v1648 = vmul.f32 %v1482, 0.01
  %v1649 = vmul.f32 %v1487, 0.01
  %v1650 = vmul.f32 %v1492, 0.01
  %v1651 = vmul.f32 %v1497, 0.01
  %v1652 = vmul.f32 %v1502, 0.01
  %v1653 = vmul.f32 %v1507, 0.01
  %v1654 = vmul.f32 %v1512, 0.01
  %v1655 = vmul.f32 %v1517, 0.01
  %v1656 = vmul.f32 %v1522, 0.01
  %v1657 = vmul.f32 %v1527, 0.01
  %v1658 = vmul.f32 %v1532, 0.01
  %v1659 = vmul.f32 %v1537, 0.01
  %v1660 = vmul.f32 %v1542, 0.01
  %v1661 = vmul.f32 %v1547, 0.01
  %v1662 = vmul.f32 %v1552, 0.01
  %v1663 = vmul.f32 %v1557, 0.01
  %v1664 = vmul.f32 %v1562, 0.01
  %v1665 = vmul.f32 %v1567, 0.01
  %v1666 = vmul.f32 %v1572, 0.01
  %v1667 = vmul.f32 %v1577, 0.01
  %v1668 = vmul.f32 %v1582, 0.01
  %v1669 = vmul.f32 %v1587, 0.01
  %v1670 = vmul.f32 %v1592, 0.01
  %v1671 = vmul.f32 %v1597, 0.01
  %v1672 = vmul.f32 %v1602, 0.01
  %v1673 = vmul.f32 %v1607, 0.01
  %v1674 = vsel %vm1610, %v1452, %v1642
  %v1675 = vsel %vm1611, %v1457, %v1643
  %v1676 = vsel %vm1612, %v1462, %v1644
  %v1677 = vsel %vm1613, %v1467, %v1645
  %v1678 = vsel %vm1614, %v1472, %v1646
  %v1679 = vsel %vm1615, %v1477, %v1647
  %v1680 = vsel %vm1616, %v1482, %v1648
  %v1681 = vsel %vm1617, %v1487, %v1649
  %v1682 = vsel %vm1618, %v1492, %v1650
  %v1683 = vsel %vm1619, %v1497, %v1651
  %v1684 = vsel %vm1620, %v1502, %v1652
  %v1685 = vsel %vm1621, %v1507, %v1653
  %v1686 = vsel %vm1622, %v1512, %v1654
  %v1687 = vsel %vm1623, %v1517, %v1655
  %v1688 = vsel %vm1624, %v1522, %v1656
  %v1689 = vsel %vm1625, %v1527, %v1657
  %v1690 = vsel %vm1626, %v1532, %v1658
  %v1691 = vsel %vm1627, %v1537, %v1659
  %v1692 = vsel %vm1628, %v1542, %v1660
  %v1693 = vsel %vm1629, %v1547, %v1661
  %v1694 = vsel %vm1630, %v1552, %v1662
  %v1695 = vsel %vm1631, %v1557, %v1663
  %v1696 = vsel %vm1632, %v1562, %v1664
  %v1697 = vsel %vm1633, %v1567, %v1665
  %v1698 = vsel %vm1634, %v1572, %v1666
  %v1699 = vsel %vm1635, %v1577, %v1667
  %v1700 = vsel %vm1636, %v1582, %v1668
  %v1701 = vsel %vm1637, %v1587, %v1669
  %v1702 = vsel %vm1638, %v1592, %v1670
  %v1703 = vsel %vm1639, %v1597, %v1671
  %v1704 = vsel %vm1640, %v1602, %v1672
  %v1705 = vsel %vm1641, %v1607, %v1673
  %v1706 = vld [vmem:[%s9] sm:$0xff]
  %v1707 = vld [vmem:[%s9 + $0x8] sm:$0xff]
  %v1708 = vld [vmem:[%s9 + $0x10] sm:$0xff]
  %v1709 = vld [vmem:[%s9 + $0x18] sm:$0xff]
  %v1710 = vld [vmem:[%s9 + $0x20] sm:$0xff]
  %v1711 = vld [vmem:[%s9 + $0x28] sm:$0xff]
  %v1712 = vld [vmem:[%s9 + $0x30] sm:$0xff]
  %v1713 = vld [vmem:[%s9 + $0x38] sm:$0xff]
  %v1714 = vld [vmem:[%s9 + $0x40] sm:$0xff]
  %v1715 = vld [vmem:[%s9 + $0x48] sm:$0xff]
  %v1716 = vld [vmem:[%s9 + $0x50] sm:$0xff]
  %v1717 = vld [vmem:[%s9 + $0x58] sm:$0xff]
  %v1718 = vld [vmem:[%s9 + $0x60] sm:$0xff]
  %v1719 = vld [vmem:[%s9 + $0x68] sm:$0xff]
  %v1720 = vld [vmem:[%s9 + $0x70] sm:$0xff]
  %v1721 = vld [vmem:[%s9 + $0x78] sm:$0xff]
  %v1722 = vld [vmem:[%s10] sm:$0x1]
  %v1724 = vlaneseq
  %v1725 = vshrl.u32 %v1724, 7
  %v1726 = vsub.s32 0, %v1725
  %v1727 = vrot.slane %v1722, %v1726
  %1729 = vmatprep.subr.mxu0 0.0
  %1730 = vmatpush1.msra.mxu0 %v1706
  %1731 = vmatprep.subr.mxu0 0.0
  %1732 = vmatpush1.msra.mxu0 %v1707
  %1733 = vmatprep.subr.mxu0 0.0
  %1734 = vmatpush1.msra.mxu0 %v1708
  %1735 = vmatprep.subr.mxu0 0.0
  %1736 = vmatpush1.msra.mxu0 %v1709
  %1737 = vmatprep.subr.mxu0 0.0
  %1738 = vmatpush1.msra.mxu0 %v1710
  %1739 = vmatprep.subr.mxu0 0.0
  %1740 = vmatpush1.msra.mxu0 %v1711
  %1741 = vmatprep.subr.mxu0 0.0
  %1742 = vmatpush1.msra.mxu0 %v1712
  %1743 = vmatprep.subr.mxu0 0.0
  %1744 = vmatpush1.msra.mxu0 %v1713
  %1745 = vmatprep.subr.mxu0 0.0
  %1746 = vmatpush1.msra.mxu0 %v1714
  %1747 = vmatprep.subr.mxu0 0.0
  %1748 = vmatpush1.msra.mxu0 %v1715
  %1749 = vmatprep.subr.mxu0 0.0
  %1750 = vmatpush1.msra.mxu0 %v1716
  %1751 = vmatprep.subr.mxu0 0.0
  %1752 = vmatpush1.msra.mxu0 %v1717
  %1753 = vmatprep.subr.mxu0 0.0
  %1754 = vmatpush1.msra.mxu0 %v1718
  %1755 = vmatprep.subr.mxu0 0.0
  %1756 = vmatpush1.msra.mxu0 %v1719
  %1757 = vmatprep.subr.mxu0 0.0
  %1758 = vmatpush1.msra.mxu0 %v1720
  %1759 = vmatprep.subr.mxu0 0.0
  %1760 = vmatpush1.msra.mxu0 %v1721
  %1761 = vmatprep.subr.mxu0 0.0
  %1762 = vmatpush1.msra.mxu0 0.0
  %1763 = vmatprep.subr.mxu0 0.0
  %1764 = vmatpush1.msra.mxu0 0.0
  %1765 = vmatprep.subr.mxu0 0.0
  %1766 = vmatpush1.msra.mxu0 0.0
  %1767 = vmatprep.subr.mxu0 0.0
  %1768 = vmatpush1.msra.mxu0 0.0
  %1769 = vmatprep.subr.mxu0 0.0
  %1770 = vmatpush1.msra.mxu0 0.0
  %1771 = vmatprep.subr.mxu0 0.0
  %1772 = vmatpush1.msra.mxu0 0.0
  %1773 = vmatprep.subr.mxu0 0.0
  %1774 = vmatpush1.msra.mxu0 0.0
  %1775 = vmatprep.subr.mxu0 0.0
  %1776 = vmatpush1.msra.mxu0 0.0
  %1777 = vmatprep.subr.mxu0 0.0
  %1778 = vmatpush1.msra.mxu0 0.0
  %1779 = vmatprep.subr.mxu0 0.0
  %1780 = vmatpush1.msra.mxu0 0.0
  %1781 = vmatprep.subr.mxu0 0.0
  %1782 = vmatpush1.msra.mxu0 0.0
  %1783 = vmatprep.subr.mxu0 0.0
  %1784 = vmatpush1.msra.mxu0 0.0
  %1785 = vmatprep.subr.mxu0 0.0
  %1786 = vmatpush1.msra.mxu0 0.0
  %1787 = vmatprep.subr.mxu0 0.0
  %1788 = vmatpush1.msra.mxu0 0.0
  %1789 = vmatprep.subr.mxu0 0.0
  %1790 = vmatpush1.msra.mxu0 0.0
  %1791 = vmatprep.subr.mxu0 0.0
  %1792 = vmatpush1.msra.mxu0 0.0
  %1793 = vmatprep.mubr.f32.mxu0 0.0
  %1794 = vmatmul.mubr.f32.gmra.mrb[0].mxu0 %v1674
  %v1795 = vpop.f32.mrb[0].mxu0
  %v1796 = vadd.f32 %v1727, %v1795
  %v1797 = vpop.f32.mrb[0].mxu0
  %1798 = vmatprep.mubr.f32.mxu0 0.0
  %1799 = vmatmul.mubr.f32.gmra.mrb[0].mxu0 %v1675
  %v1800 = vpop.f32.mrb[0].mxu0
  %v1801 = vadd.f32 %v1727, %v1800
  %v1802 = vpop.f32.mrb[0].mxu0
  %1803 = vmatprep.mubr.f32.mxu0 0.0
  %1804 = vmatmul.mubr.f32.gmra.mrb[0].mxu0 %v1676
  %v1805 = vpop.f32.mrb[0].mxu0
  %v1806 = vadd.f32 %v1727, %v1805
  %v1807 = vpop.f32.mrb[0].mxu0
  %1808 = vmatprep.mubr.f32.mxu0 0.0
  %1809 = vmatmul.mubr.f32.gmra.mrb[0].mxu0 %v1677
  %v1810 = vpop.f32.mrb[0].mxu0
  %v1811 = vadd.f32 %v1727, %v1810
  %v1812 = vpop.f32.mrb[0].mxu0
  %1813 = vmatprep.mubr.f32.mxu0 0.0
  %1814 = vmatmul.mubr.f32.gmra.mrb[0].mxu0 %v1678
  %v1815 = vpop.f32.mrb[0].mxu0
  %v1816 = vadd.f32 %v1727, %v1815
  %v1817 = vpop.f32.mrb[0].mxu0
  %1818 = vmatprep.mubr.f32.mxu0 0.0
  %1819 = vmatmul.mubr.f32.gmra.mrb[0].mxu0 %v1679
  %v1820 = vpop.f32.mrb[0].mxu0
  %v1821 = vadd.f32 %v1727, %v1820
  %v1822 = vpop.f32.mrb[0].mxu0
  %1823 = vmatprep.mubr.f32.mxu0 0.0
  %1824 = vmatmul.mubr.f32.gmra.mrb[0].mxu0 %v1680
  %v1825 = vpop.f32.mrb[0].mxu0
  %v1826 = vadd.f32 %v1727, %v1825
  %v1827 = vpop.f32.mrb[0].mxu0
  %1828 = vmatprep.mubr.f32.mxu0 0.0
  %1829 = vmatmul.mubr.f32.gmra.mrb[0].mxu0 %v1681
  %v1830 = vpop.f32.mrb[0].mxu0
  %v1831 = vadd.f32 %v1727, %v1830
  %v1832 = vpop.f32.mrb[0].mxu0
  %1833 = vmatprep.mubr.f32.mxu0 0.0
  %1834 = vmatmul.mubr.f32.gmra.mrb[0].mxu0 %v1682
  %v1835 = vpop.f32.mrb[0].mxu0
  %v1836 = vadd.f32 %v1727, %v1835
  %v1837 = vpop.f32.mrb[0].mxu0
  %1838 = vmatprep.mubr.f32.mxu0 0.0
  %1839 = vmatmul.mubr.f32.gmra.mrb[0].mxu0 %v1683
  %v1840 = vpop.f32.mrb[0].mxu0
  %v1841 = vadd.f32 %v1727, %v1840
  %v1842 = vpop.f32.mrb[0].mxu0
  %1843 = vmatprep.mubr.f32.mxu0 0.0
  %1844 = vmatmul.mubr.f32.gmra.mrb[0].mxu0 %v1684
  %v1845 = vpop.f32.mrb[0].mxu0
  %v1846 = vadd.f32 %v1727, %v1845
  %v1847 = vpop.f32.mrb[0].mxu0
  %1848 = vmatprep.mubr.f32.mxu0 0.0
  %1849 = vmatmul.mubr.f32.gmra.mrb[0].mxu0 %v1685
  %v1850 = vpop.f32.mrb[0].mxu0
  %v1851 = vadd.f32 %v1727, %v1850
  %v1852 = vpop.f32.mrb[0].mxu0
  %1853 = vmatprep.mubr.f32.mxu0 0.0
  %1854 = vmatmul.mubr.f32.gmra.mrb[0].mxu0 %v1686
  %v1855 = vpop.f32.mrb[0].mxu0
  %v1856 = vadd.f32 %v1727, %v1855
  %v1857 = vpop.f32.mrb[0].mxu0
  %1858 = vmatprep.mubr.f32.mxu0 0.0
  %1859 = vmatmul.mubr.f32.gmra.mrb[0].mxu0 %v1687
  %v1860 = vpop.f32.mrb[0].mxu0
  %v1861 = vadd.f32 %v1727, %v1860
  %v1862 = vpop.f32.mrb[0].mxu0
  %1863 = vmatprep.mubr.f32.mxu0 0.0
  %1864 = vmatmul.mubr.f32.gmra.mrb[0].mxu0 %v1688
  %v1865 = vpop.f32.mrb[0].mxu0
  %v1866 = vadd.f32 %v1727, %v1865
  %v1867 = vpop.f32.mrb[0].mxu0
  %1868 = vmatprep.mubr.f32.mxu0 0.0
  %1869 = vmatmul.mubr.f32.gmra.mrb[0].mxu0 %v1689
  %v1870 = vpop.f32.mrb[0].mxu0
  %v1871 = vadd.f32 %v1727, %v1870
  %v1872 = vpop.f32.mrb[0].mxu0
  %1873 = vmatprep.mubr.f32.mxu0 0.0
  %1874 = vmatmul.mubr.f32.gmra.mrb[0].mxu0 %v1690
  %v1875 = vpop.f32.mrb[0].mxu0
  %v1876 = vadd.f32 %v1727, %v1875
  %v1877 = vpop.f32.mrb[0].mxu0
  %1878 = vmatprep.mubr.f32.mxu0 0.0
  %1879 = vmatmul.mubr.f32.gmra.mrb[0].mxu0 %v1691
  %v1880 = vpop.f32.mrb[0].mxu0
  %v1881 = vadd.f32 %v1727, %v1880
  %v1882 = vpop.f32.mrb[0].mxu0
  %1883 = vmatprep.mubr.f32.mxu0 0.0
  %1884 = vmatmul.mubr.f32.gmra.mrb[0].mxu0 %v1692
  %v1885 = vpop.f32.mrb[0].mxu0
  %v1886 = vadd.f32 %v1727, %v1885
  %v1887 = vpop.f32.mrb[0].mxu0
  %1888 = vmatprep.mubr.f32.mxu0 0.0
  %1889 = vmatmul.mubr.f32.gmra.mrb[0].mxu0 %v1693
  %v1890 = vpop.f32.mrb[0].mxu0
  %v1891 = vadd.f32 %v1727, %v1890
  %v1892 = vpop.f32.mrb[0].mxu0
  %1893 = vmatprep.mubr.f32.mxu0 0.0
  %1894 = vmatmul.mubr.f32.gmra.mrb[0].mxu0 %v1694
  %v1895 = vpop.f32.mrb[0].mxu0
  %v1896 = vadd.f32 %v1727, %v1895
  %v1897 = vpop.f32.mrb[0].mxu0
  %1898 = vmatprep.mubr.f32.mxu0 0.0
  %1899 = vmatmul.mubr.f32.gmra.mrb[0].mxu0 %v1695
  %v1900 = vpop.f32.mrb[0].mxu0
  %v1901 = vadd.f32 %v1727, %v1900
  %v1902 = vpop.f32.mrb[0].mxu0
  %1903 = vmatprep.mubr.f32.mxu0 0.0
  %1904 = vmatmul.mubr.f32.gmra.mrb[0].mxu0 %v1696
  %v1905 = vpop.f32.mrb[0].mxu0
  %v1906 = vadd.f32 %v1727, %v1905
  %v1907 = vpop.f32.mrb[0].mxu0
  %1908 = vmatprep.mubr.f32.mxu0 0.0
  %1909 = vmatmul.mubr.f32.gmra.mrb[0].mxu0 %v1697
  %v1910 = vpop.f32.mrb[0].mxu0
  %v1911 = vadd.f32 %v1727, %v1910
  %v1912 = vpop.f32.mrb[0].mxu0
  %1913 = vmatprep.mubr.f32.mxu0 0.0
  %1914 = vmatmul.mubr.f32.gmra.mrb[0].mxu0 %v1698
  %v1915 = vpop.f32.mrb[0].mxu0
  %v1916 = vadd.f32 %v1727, %v1915
  %v1917 = vpop.f32.mrb[0].mxu0
  %1918 = vmatprep.mubr.f32.mxu0 0.0
  %1919 = vmatmul.mubr.f32.gmra.mrb[0].mxu0 %v1699
  %v1920 = vpop.f32.mrb[0].mxu0
  %v1921 = vadd.f32 %v1727, %v1920
  %v1922 = vpop.f32.mrb[0].mxu0
  %1923 = vmatprep.mubr.f32.mxu0 0.0
  %1924 = vmatmul.mubr.f32.gmra.mrb[0].mxu0 %v1700
  %v1925 = vpop.f32.mrb[0].mxu0
  %v1926 = vadd.f32 %v1727, %v1925
  %v1927 = vpop.f32.mrb[0].mxu0
  %1928 = vmatprep.mubr.f32.mxu0 0.0
  %1929 = vmatmul.mubr.f32.gmra.mrb[0].mxu0 %v1701
  %v1930 = vpop.f32.mrb[0].mxu0
  %v1931 = vadd.f32 %v1727, %v1930
  %v1932 = vpop.f32.mrb[0].mxu0
  %1933 = vmatprep.mubr.f32.mxu0 0.0
  %1934 = vmatmul.mubr.f32.gmra.mrb[0].mxu0 %v1702
  %v1935 = vpop.f32.mrb[0].mxu0
  %v1936 = vadd.f32 %v1727, %v1935
  %v1937 = vpop.f32.mrb[0].mxu0
  %1938 = vmatprep.mubr.f32.mxu0 0.0
  %1939 = vmatmul.mubr.f32.gmra.mrb[0].mxu0 %v1703
  %v1940 = vpop.f32.mrb[0].mxu0
  %v1941 = vadd.f32 %v1727, %v1940
  %v1942 = vpop.f32.mrb[0].mxu0
  %1943 = vmatprep.mubr.f32.mxu0 0.0
  %1944 = vmatmul.mubr.f32.gmra.mrb[0].mxu0 %v1704
  %v1945 = vpop.f32.mrb[0].mxu0
  %v1946 = vadd.f32 %v1727, %v1945
  %v1947 = vpop.f32.mrb[0].mxu0
  %1948 = vmatprep.mubr.f32.mxu0 0.0
  %1949 = vmatmul.mubr.f32.gmra.mrb[0].mxu0 %v1705
  %v1950 = vpop.f32.mrb[0].mxu0
  %v1951 = vadd.f32 %v1727, %v1950
  %v1952 = vpop.f32.mrb[0].mxu0
  %1953 = vdwg.mxu0
  %vm1954 = vcmp.gt.f32.partialorder %v1796, 0.0
  %vm1955 = vcmp.gt.f32.partialorder %v1801, 0.0
  %vm1956 = vcmp.gt.f32.partialorder %v1806, 0.0
  %vm1957 = vcmp.gt.f32.partialorder %v1811, 0.0
  %vm1958 = vcmp.gt.f32.partialorder %v1816, 0.0
  %vm1959 = vcmp.gt.f32.partialorder %v1821, 0.0
  %vm1960 = vcmp.gt.f32.partialorder %v1826, 0.0
  %vm1961 = vcmp.gt.f32.partialorder %v1831, 0.0
  %vm1962 = vcmp.gt.f32.partialorder %v1836, 0.0
  %vm1963 = vcmp.gt.f32.partialorder %v1841, 0.0
  %vm1964 = vcmp.gt.f32.partialorder %v1846, 0.0
  %vm1965 = vcmp.gt.f32.partialorder %v1851, 0.0
  %vm1966 = vcmp.gt.f32.partialorder %v1856, 0.0
  %vm1967 = vcmp.gt.f32.partialorder %v1861, 0.0
  %vm1968 = vcmp.gt.f32.partialorder %v1866, 0.0
  %vm1969 = vcmp.gt.f32.partialorder %v1871, 0.0
  %vm1970 = vcmp.gt.f32.partialorder %v1876, 0.0
  %vm1971 = vcmp.gt.f32.partialorder %v1881, 0.0
  %vm1972 = vcmp.gt.f32.partialorder %v1886, 0.0
  %vm1973 = vcmp.gt.f32.partialorder %v1891, 0.0
  %vm1974 = vcmp.gt.f32.partialorder %v1896, 0.0
  %vm1975 = vcmp.gt.f32.partialorder %v1901, 0.0
  %vm1976 = vcmp.gt.f32.partialorder %v1906, 0.0
  %vm1977 = vcmp.gt.f32.partialorder %v1911, 0.0
  %vm1978 = vcmp.gt.f32.partialorder %v1916, 0.0
  %vm1979 = vcmp.gt.f32.partialorder %v1921, 0.0
  %vm1980 = vcmp.gt.f32.partialorder %v1926, 0.0
  %vm1981 = vcmp.gt.f32.partialorder %v1931, 0.0
  %vm1982 = vcmp.gt.f32.partialorder %v1936, 0.0
  %vm1983 = vcmp.gt.f32.partialorder %v1941, 0.0
  %vm1984 = vcmp.gt.f32.partialorder %v1946, 0.0
  %vm1985 = vcmp.gt.f32.partialorder %v1951, 0.0
  %v1986 = vmul.f32 %v1796, 0.01
  %v1987 = vmul.f32 %v1801, 0.01
  %v1988 = vmul.f32 %v1806, 0.01
  %v1989 = vmul.f32 %v1811, 0.01
  %v1990 = vmul.f32 %v1816, 0.01
  %v1991 = vmul.f32 %v1821, 0.01
  %v1992 = vmul.f32 %v1826, 0.01
  %v1993 = vmul.f32 %v1831, 0.01
  %v1994 = vmul.f32 %v1836, 0.01
  %v1995 = vmul.f32 %v1841, 0.01
  %v1996 = vmul.f32 %v1846, 0.01
  %v1997 = vmul.f32 %v1851, 0.01
  %v1998 = vmul.f32 %v1856, 0.01
  %v1999 = vmul.f32 %v1861, 0.01
  %v2000 = vmul.f32 %v1866, 0.01
  %v2001 = vmul.f32 %v1871, 0.01
  %v2002 = vmul.f32 %v1876, 0.01
  %v2003 = vmul.f32 %v1881, 0.01
  %v2004 = vmul.f32 %v1886, 0.01
  %v2005 = vmul.f32 %v1891, 0.01
  %v2006 = vmul.f32 %v1896, 0.01
  %v2007 = vmul.f32 %v1901, 0.01
  %v2008 = vmul.f32 %v1906, 0.01
  %v2009 = vmul.f32 %v1911, 0.01
  %v2010 = vmul.f32 %v1916, 0.01
  %v2011 = vmul.f32 %v1921, 0.01
  %v2012 = vmul.f32 %v1926, 0.01
  %v2013 = vmul.f32 %v1931, 0.01
  %v2014 = vmul.f32 %v1936, 0.01
  %v2015 = vmul.f32 %v1941, 0.01
  %v2016 = vmul.f32 %v1946, 0.01
  %v2017 = vmul.f32 %v1951, 0.01
  %v2018 = vsel %vm1954, %v1796, %v1986
  %v2019 = vsel %vm1955, %v1801, %v1987
  %v2020 = vsel %vm1956, %v1806, %v1988
  %v2021 = vsel %vm1957, %v1811, %v1989
  %v2022 = vsel %vm1958, %v1816, %v1990
  %v2023 = vsel %vm1959, %v1821, %v1991
  %v2024 = vsel %vm1960, %v1826, %v1992
  %v2025 = vsel %vm1961, %v1831, %v1993
  %v2026 = vsel %vm1962, %v1836, %v1994
  %v2027 = vsel %vm1963, %v1841, %v1995
  %v2028 = vsel %vm1964, %v1846, %v1996
  %v2029 = vsel %vm1965, %v1851, %v1997
  %v2030 = vsel %vm1966, %v1856, %v1998
  %v2031 = vsel %vm1967, %v1861, %v1999
  %v2032 = vsel %vm1968, %v1866, %v2000
  %v2033 = vsel %vm1969, %v1871, %v2001
  %v2034 = vsel %vm1970, %v1876, %v2002
  %v2035 = vsel %vm1971, %v1881, %v2003
  %v2036 = vsel %vm1972, %v1886, %v2004
  %v2037 = vsel %vm1973, %v1891, %v2005
  %v2038 = vsel %vm1974, %v1896, %v2006
  %v2039 = vsel %vm1975, %v1901, %v2007
  %v2040 = vsel %vm1976, %v1906, %v2008
  %v2041 = vsel %vm1977, %v1911, %v2009
  %v2042 = vsel %vm1978, %v1916, %v2010
  %v2043 = vsel %vm1979, %v1921, %v2011
  %v2044 = vsel %vm1980, %v1926, %v2012
  %v2045 = vsel %vm1981, %v1931, %v2013
  %v2046 = vsel %vm1982, %v1936, %v2014
  %v2047 = vsel %vm1983, %v1941, %v2015
  %v2048 = vsel %vm1984, %v1946, %v2016
  %v2049 = vsel %vm1985, %v1951, %v2017
  %v2050 = vld [vmem:[%s11] sm:$0xff]
  %v2051 = vld [vmem:[%s11 + $0x8] sm:$0xff]
  %v2052 = vld [vmem:[%s11 + $0x10] sm:$0xff]
  %v2053 = vld [vmem:[%s11 + $0x18] sm:$0xff]
  %v2054 = vld [vmem:[%s11 + $0x20] sm:$0xff]
  %v2055 = vld [vmem:[%s11 + $0x28] sm:$0xff]
  %v2056 = vld [vmem:[%s11 + $0x30] sm:$0xff]
  %v2057 = vld [vmem:[%s11 + $0x38] sm:$0xff]
  %v2058 = vld [vmem:[%s12] sm:$0x1]
  %v2060 = vlaneseq
  %v2061 = vshrl.u32 %v2060, 7
  %v2062 = vsub.s32 0, %v2061
  %v2063 = vrot.slane %v2058, %v2062
  %v2066 = vsel %vm435, %v2018, 0
  %v2069 = vsel %vm435, %v2019, 0
  %v2072 = vsel %vm435, %v2020, 0
  %v2075 = vsel %vm435, %v2021, 0
  %v2078 = vsel %vm435, %v2022, 0
  %v2081 = vsel %vm435, %v2023, 0
  %v2084 = vsel %vm435, %v2024, 0
  %v2087 = vsel %vm435, %v2025, 0
  %v2090 = vsel %vm435, %v2026, 0
  %v2093 = vsel %vm435, %v2027, 0
  %v2096 = vsel %vm435, %v2028, 0
  %v2099 = vsel %vm435, %v2029, 0
  %v2102 = vsel %vm435, %v2030, 0
  %v2105 = vsel %vm435, %v2031, 0
  %v2108 = vsel %vm435, %v2032, 0
  %v2111 = vsel %vm435, %v2033, 0
  %v2114 = vsel %vm435, %v2034, 0
  %v2117 = vsel %vm435, %v2035, 0
  %v2120 = vsel %vm435, %v2036, 0
  %v2123 = vsel %vm435, %v2037, 0
  %v2126 = vsel %vm435, %v2038, 0
  %v2129 = vsel %vm435, %v2039, 0
  %v2132 = vsel %vm435, %v2040, 0
  %v2135 = vsel %vm435, %v2041, 0
  %v2138 = vsel %vm435, %v2042, 0
  %v2141 = vsel %vm435, %v2043, 0
  %v2144 = vsel %vm435, %v2044, 0
  %v2147 = vsel %vm435, %v2045, 0
  %v2150 = vsel %vm435, %v2046, 0
  %v2153 = vsel %vm435, %v2047, 0
  %v2156 = vsel %vm435, %v2048, 0
  %v2159 = vsel %vm435, %v2049, 0
  %2161 = vmatprep.subr.mxu0 0.0
  %2162 = vmatpush1.msra.mxu0 %v2050
  %2163 = vmatprep.subr.mxu0 0.0
  %2164 = vmatpush1.msra.mxu0 %v2051
  %2165 = vmatprep.subr.mxu0 0.0
  %2166 = vmatpush1.msra.mxu0 %v2052
  %2167 = vmatprep.subr.mxu0 0.0
  %2168 = vmatpush1.msra.mxu0 %v2053
  %2169 = vmatprep.subr.mxu0 0.0
  %2170 = vmatpush1.msra.mxu0 %v2054
  %2171 = vmatprep.subr.mxu0 0.0
  %2172 = vmatpush1.msra.mxu0 %v2055
  %2173 = vmatprep.subr.mxu0 0.0
  %2174 = vmatpush1.msra.mxu0 %v2056
  %2175 = vmatprep.subr.mxu0 0.0
  %2176 = vmatpush1.msra.mxu0 %v2057
  %2177 = vmatprep.subr.mxu0 0.0
  %2178 = vmatpush1.msra.mxu0 0.0
  %2179 = vmatprep.subr.mxu0 0.0
  %2180 = vmatpush1.msra.mxu0 0.0
  %2181 = vmatprep.subr.mxu0 0.0
  %2182 = vmatpush1.msra.mxu0 0.0
  %2183 = vmatprep.subr.mxu0 0.0
  %2184 = vmatpush1.msra.mxu0 0.0
  %2185 = vmatprep.subr.mxu0 0.0
  %2186 = vmatpush1.msra.mxu0 0.0
  %2187 = vmatprep.subr.mxu0 0.0
  %2188 = vmatpush1.msra.mxu0 0.0
  %2189 = vmatprep.subr.mxu0 0.0
  %2190 = vmatpush1.msra.mxu0 0.0
  %2191 = vmatprep.subr.mxu0 0.0
  %2192 = vmatpush1.msra.mxu0 0.0
  %2193 = vmatprep.subr.mxu0 0.0
  %2194 = vmatpush1.msra.mxu0 0.0
  %2195 = vmatprep.subr.mxu0 0.0
  %2196 = vmatpush1.msra.mxu0 0.0
  %2197 = vmatprep.subr.mxu0 0.0
  %2198 = vmatpush1.msra.mxu0 0.0
  %2199 = vmatprep.subr.mxu0 0.0
  %2200 = vmatpush1.msra.mxu0 0.0
  %2201 = vmatprep.subr.mxu0 0.0
  %2202 = vmatpush1.msra.mxu0 0.0
  %2203 = vmatprep.subr.mxu0 0.0
  %2204 = vmatpush1.msra.mxu0 0.0
  %2205 = vmatprep.subr.mxu0 0.0
  %2206 = vmatpush1.msra.mxu0 0.0
  %2207 = vmatprep.subr.mxu0 0.0
  %2208 = vmatpush1.msra.mxu0 0.0
  %2209 = vmatprep.subr.mxu0 0.0
  %2210 = vmatpush1.msra.mxu0 0.0
  %2211 = vmatprep.subr.mxu0 0.0
  %2212 = vmatpush1.msra.mxu0 0.0
  %2213 = vmatprep.subr.mxu0 0.0
  %2214 = vmatpush1.msra.mxu0 0.0
  %2215 = vmatprep.subr.mxu0 0.0
  %2216 = vmatpush1.msra.mxu0 0.0
  %2217 = vmatprep.subr.mxu0 0.0
  %2218 = vmatpush1.msra.mxu0 0.0
  %2219 = vmatprep.subr.mxu0 0.0
  %2220 = vmatpush1.msra.mxu0 0.0
  %2221 = vmatprep.subr.mxu0 0.0
  %2222 = vmatpush1.msra.mxu0 0.0
  %2223 = vmatprep.subr.mxu0 0.0
  %2224 = vmatpush1.msra.mxu0 0.0
  %2225 = vmatprep.mubr.f32.mxu0 0.0
  %2226 = vmatmul.mubr.f32.gmra.mrb[0].mxu0 %v2066
  %v2227 = vpop.f32.mrb[0].mxu0
  %v2228 = vadd.f32 %v2063, %v2227
  %v2229 = vpop.f32.mrb[0].mxu0
  %2230 = vmatprep.mubr.f32.mxu0 0.0
  %2231 = vmatmul.mubr.f32.gmra.mrb[0].mxu0 %v2069
  %v2232 = vpop.f32.mrb[0].mxu0
  %v2233 = vadd.f32 %v2063, %v2232
  %v2234 = vpop.f32.mrb[0].mxu0
  %2235 = vmatprep.mubr.f32.mxu0 0.0
  %2236 = vmatmul.mubr.f32.gmra.mrb[0].mxu0 %v2072
  %v2237 = vpop.f32.mrb[0].mxu0
  %v2238 = vadd.f32 %v2063, %v2237
  %v2239 = vpop.f32.mrb[0].mxu0
  %2240 = vmatprep.mubr.f32.mxu0 0.0
  %2241 = vmatmul.mubr.f32.gmra.mrb[0].mxu0 %v2075
  %v2242 = vpop.f32.mrb[0].mxu0
  %v2243 = vadd.f32 %v2063, %v2242
  %v2244 = vpop.f32.mrb[0].mxu0
  %2245 = vmatprep.mubr.f32.mxu0 0.0
  %2246 = vmatmul.mubr.f32.gmra.mrb[0].mxu0 %v2078
  %v2247 = vpop.f32.mrb[0].mxu0
  %v2248 = vadd.f32 %v2063, %v2247
  %v2249 = vpop.f32.mrb[0].mxu0
  %2250 = vmatprep.mubr.f32.mxu0 0.0
  %2251 = vmatmul.mubr.f32.gmra.mrb[0].mxu0 %v2081
  %v2252 = vpop.f32.mrb[0].mxu0
  %v2253 = vadd.f32 %v2063, %v2252
  %v2254 = vpop.f32.mrb[0].mxu0
  %2255 = vmatprep.mubr.f32.mxu0 0.0
  %2256 = vmatmul.mubr.f32.gmra.mrb[0].mxu0 %v2084
  %v2257 = vpop.f32.mrb[0].mxu0
  %v2258 = vadd.f32 %v2063, %v2257
  %v2259 = vpop.f32.mrb[0].mxu0
  %2260 = vmatprep.mubr.f32.mxu0 0.0
  %2261 = vmatmul.mubr.f32.gmra.mrb[0].mxu0 %v2087
  %v2262 = vpop.f32.mrb[0].mxu0
  %v2263 = vadd.f32 %v2063, %v2262
  %v2264 = vpop.f32.mrb[0].mxu0
  %2265 = vmatprep.mubr.f32.mxu0 0.0
  %2266 = vmatmul.mubr.f32.gmra.mrb[0].mxu0 %v2090
  %v2267 = vpop.f32.mrb[0].mxu0
  %v2268 = vadd.f32 %v2063, %v2267
  %v2269 = vpop.f32.mrb[0].mxu0
  %2270 = vmatprep.mubr.f32.mxu0 0.0
  %2271 = vmatmul.mubr.f32.gmra.mrb[0].mxu0 %v2093
  %v2272 = vpop.f32.mrb[0].mxu0
  %v2273 = vadd.f32 %v2063, %v2272
  %v2274 = vpop.f32.mrb[0].mxu0
  %2275 = vmatprep.mubr.f32.mxu0 0.0
  %2276 = vmatmul.mubr.f32.gmra.mrb[0].mxu0 %v2096
  %v2277 = vpop.f32.mrb[0].mxu0
  %v2278 = vadd.f32 %v2063, %v2277
  %v2279 = vpop.f32.mrb[0].mxu0
  %2280 = vmatprep.mubr.f32.mxu0 0.0
  %2281 = vmatmul.mubr.f32.gmra.mrb[0].mxu0 %v2099
  %v2282 = vpop.f32.mrb[0].mxu0
  %v2283 = vadd.f32 %v2063, %v2282
  %v2284 = vpop.f32.mrb[0].mxu0
  %2285 = vmatprep.mubr.f32.mxu0 0.0
  %2286 = vmatmul.mubr.f32.gmra.mrb[0].mxu0 %v2102
  %v2287 = vpop.f32.mrb[0].mxu0
  %v2288 = vadd.f32 %v2063, %v2287
  %v2289 = vpop.f32.mrb[0].mxu0
  %2290 = vmatprep.mubr.f32.mxu0 0.0
  %2291 = vmatmul.mubr.f32.gmra.mrb[0].mxu0 %v2105
  %v2292 = vpop.f32.mrb[0].mxu0
  %v2293 = vadd.f32 %v2063, %v2292
  %v2294 = vpop.f32.mrb[0].mxu0
  %2295 = vmatprep.mubr.f32.mxu0 0.0
  %2296 = vmatmul.mubr.f32.gmra.mrb[0].mxu0 %v2108
  %v2297 = vpop.f32.mrb[0].mxu0
  %v2298 = vadd.f32 %v2063, %v2297
  %v2299 = vpop.f32.mrb[0].mxu0
  %2300 = vmatprep.mubr.f32.mxu0 0.0
  %2301 = vmatmul.mubr.f32.gmra.mrb[0].mxu0 %v2111
  %v2302 = vpop.f32.mrb[0].mxu0
  %v2303 = vadd.f32 %v2063, %v2302
  %v2304 = vpop.f32.mrb[0].mxu0
  %2305 = vmatprep.mubr.f32.mxu0 0.0
  %2306 = vmatmul.mubr.f32.gmra.mrb[0].mxu0 %v2114
  %v2307 = vpop.f32.mrb[0].mxu0
  %v2308 = vadd.f32 %v2063, %v2307
  %v2309 = vpop.f32.mrb[0].mxu0
  %2310 = vmatprep.mubr.f32.mxu0 0.0
  %2311 = vmatmul.mubr.f32.gmra.mrb[0].mxu0 %v2117
  %v2312 = vpop.f32.mrb[0].mxu0
  %v2313 = vadd.f32 %v2063, %v2312
  %v2314 = vpop.f32.mrb[0].mxu0
  %2315 = vmatprep.mubr.f32.mxu0 0.0
  %2316 = vmatmul.mubr.f32.gmra.mrb[0].mxu0 %v2120
  %v2317 = vpop.f32.mrb[0].mxu0
  %v2318 = vadd.f32 %v2063, %v2317
  %v2319 = vpop.f32.mrb[0].mxu0
  %2320 = vmatprep.mubr.f32.mxu0 0.0
  %2321 = vmatmul.mubr.f32.gmra.mrb[0].mxu0 %v2123
  %v2322 = vpop.f32.mrb[0].mxu0
  %v2323 = vadd.f32 %v2063, %v2322
  %v2324 = vpop.f32.mrb[0].mxu0
  %2325 = vmatprep.mubr.f32.mxu0 0.0
  %2326 = vmatmul.mubr.f32.gmra.mrb[0].mxu0 %v2126
  %v2327 = vpop.f32.mrb[0].mxu0
  %v2328 = vadd.f32 %v2063, %v2327
  %v2329 = vpop.f32.mrb[0].mxu0
  %2330 = vmatprep.mubr.f32.mxu0 0.0
  %2331 = vmatmul.mubr.f32.gmra.mrb[0].mxu0 %v2129
  %v2332 = vpop.f32.mrb[0].mxu0
  %v2333 = vadd.f32 %v2063, %v2332
  %v2334 = vpop.f32.mrb[0].mxu0
  %2335 = vmatprep.mubr.f32.mxu0 0.0
  %2336 = vmatmul.mubr.f32.gmra.mrb[0].mxu0 %v2132
  %v2337 = vpop.f32.mrb[0].mxu0
  %v2338 = vadd.f32 %v2063, %v2337
  %v2339 = vpop.f32.mrb[0].mxu0
  %2340 = vmatprep.mubr.f32.mxu0 0.0
  %2341 = vmatmul.mubr.f32.gmra.mrb[0].mxu0 %v2135
  %v2342 = vpop.f32.mrb[0].mxu0
  %v2343 = vadd.f32 %v2063, %v2342
  %v2344 = vpop.f32.mrb[0].mxu0
  %2345 = vmatprep.mubr.f32.mxu0 0.0
  %2346 = vmatmul.mubr.f32.gmra.mrb[0].mxu0 %v2138
  %v2347 = vpop.f32.mrb[0].mxu0
  %v2348 = vadd.f32 %v2063, %v2347
  %v2349 = vpop.f32.mrb[0].mxu0
  %2350 = vmatprep.mubr.f32.mxu0 0.0
  %2351 = vmatmul.mubr.f32.gmra.mrb[0].mxu0 %v2141
  %v2352 = vpop.f32.mrb[0].mxu0
  %v2353 = vadd.f32 %v2063, %v2352
  %v2354 = vpop.f32.mrb[0].mxu0
  %2355 = vmatprep.mubr.f32.mxu0 0.0
  %2356 = vmatmul.mubr.f32.gmra.mrb[0].mxu0 %v2144
  %v2357 = vpop.f32.mrb[0].mxu0
  %v2358 = vadd.f32 %v2063, %v2357
  %v2359 = vpop.f32.mrb[0].mxu0
  %2360 = vmatprep.mubr.f32.mxu0 0.0
  %2361 = vmatmul.mubr.f32.gmra.mrb[0].mxu0 %v2147
  %v2362 = vpop.f32.mrb[0].mxu0
  %v2363 = vadd.f32 %v2063, %v2362
  %v2364 = vpop.f32.mrb[0].mxu0
  %2365 = vmatprep.mubr.f32.mxu0 0.0
  %2366 = vmatmul.mubr.f32.gmra.mrb[0].mxu0 %v2150
  %v2367 = vpop.f32.mrb[0].mxu0
  %v2368 = vadd.f32 %v2063, %v2367
  %v2369 = vpop.f32.mrb[0].mxu0
  %2370 = vmatprep.mubr.f32.mxu0 0.0
  %2371 = vmatmul.mubr.f32.gmra.mrb[0].mxu0 %v2153
  %v2372 = vpop.f32.mrb[0].mxu0
  %v2373 = vadd.f32 %v2063, %v2372
  %v2374 = vpop.f32.mrb[0].mxu0
  %2375 = vmatprep.mubr.f32.mxu0 0.0
  %2376 = vmatmul.mubr.f32.gmra.mrb[0].mxu0 %v2156
  %v2377 = vpop.f32.mrb[0].mxu0
  %v2378 = vadd.f32 %v2063, %v2377
  %v2379 = vpop.f32.mrb[0].mxu0
  %2380 = vmatprep.mubr.f32.mxu0 0.0
  %2381 = vmatmul.mubr.f32.gmra.mrb[0].mxu0 %v2159
  %v2382 = vpop.f32.mrb[0].mxu0
  %v2383 = vadd.f32 %v2063, %v2382
  %v2384 = vpop.f32.mrb[0].mxu0
  %2385 = vdwg.mxu0
  %2386 = vst [vmem:[%s13] sm:$0xff] %v2228
  %2387 = vst [vmem:[%s13 + $0x8] sm:$0xff] %v2233
  %2388 = vst [vmem:[%s13 + $0x10] sm:$0xff] %v2238
  %2389 = vst [vmem:[%s13 + $0x18] sm:$0xff] %v2243
  %2390 = vst [vmem:[%s13 + $0x20] sm:$0xff] %v2248
  %2391 = vst [vmem:[%s13 + $0x28] sm:$0xff] %v2253
  %2392 = vst [vmem:[%s13 + $0x30] sm:$0xff] %v2258
  %2393 = vst [vmem:[%s13 + $0x38] sm:$0xff] %v2263
  %2394 = vst [vmem:[%s13 + $0x40] sm:$0xff] %v2268
  %2395 = vst [vmem:[%s13 + $0x48] sm:$0xff] %v2273
  %2396 = vst [vmem:[%s13 + $0x50] sm:$0xff] %v2278
  %2397 = vst [vmem:[%s13 + $0x58] sm:$0xff] %v2283
  %2398 = vst [vmem:[%s13 + $0x60] sm:$0xff] %v2288
  %2399 = vst [vmem:[%s13 + $0x68] sm:$0xff] %v2293
  %2400 = vst [vmem:[%s13 + $0x70] sm:$0xff] %v2298
  %2401 = vst [vmem:[%s13 + $0x78] sm:$0xff] %v2303
  %2402 = vst [vmem:[%s13 + $0x80] sm:$0xff] %v2308
  %2403 = vst [vmem:[%s13 + $0x88] sm:$0xff] %v2313
  %2404 = vst [vmem:[%s13 + $0x90] sm:$0xff] %v2318
  %2405 = vst [vmem:[%s13 + $0x98] sm:$0xff] %v2323
  %2406 = vst [vmem:[%s13 + $0xa0] sm:$0xff] %v2328
  %2407 = vst [vmem:[%s13 + $0xa8] sm:$0xff] %v2333
  %2408 = vst [vmem:[%s13 + $0xb0] sm:$0xff] %v2338
  %2409 = vst [vmem:[%s13 + $0xb8] sm:$0xff] %v2343
  %2410 = vst [vmem:[%s13 + $0xc0] sm:$0xff] %v2348
  %2411 = vst [vmem:[%s13 + $0xc8] sm:$0xff] %v2353
  %2412 = vst [vmem:[%s13 + $0xd0] sm:$0xff] %v2358
  %2413 = vst [vmem:[%s13 + $0xd8] sm:$0xff] %v2363
  %2414 = vst [vmem:[%s13 + $0xe0] sm:$0xff] %v2368
  %2415 = vst [vmem:[%s13 + $0xe8] sm:$0xff] %v2373
  %2416 = vst [vmem:[%s13 + $0xf0] sm:$0xff] %v2378
  %2417 = vst [vmem:[%s13 + $0xf8] sm:$0xff] %v2383
  // Predicated region
  $region54: #{ik_mlp_pallas.1} parent=0 // pred_check
    _
  $region55: #{ik_mlp_pallas.1} parent=0 // pred_check_branch
    %2419 = sbr.rel (0) target = $region57
  $region56: #{ik_mlp_pallas.1} parent=0 // pred_region
    _
  $region57: #{ik_mlp_pallas.1} parent=0 // pred_fallthru
    _
  // Predicated region
  $region58: #{ik_mlp_pallas.1} parent=0 // pred_check
    _
  $region59: #{ik_mlp_pallas.1} parent=0 // pred_check_branch
    %2421 = sbr.rel (0) target = $region61
  $region60: #{ik_mlp_pallas.1} parent=0 // pred_region
    _
  $region61: #{ik_mlp_pallas.1} parent=0 // pred_fallthru
    _

</llo_original>
